<compile_context>
chip_gen: v7x
topology: tpu7x:2x2x1
jax: 0.10.0
libtpu: 0.0.40
codegen_flags: <defaults>
</compile_context>

<pallas_src>
import jax
import jax.numpy as jnp
from jax.experimental import pallas as pl
from jax.experimental.pallas import tpu as pltpu

HIDDEN = 128  # fixed by the module (lin1/lin2/lin3 all output 128)


def _softplus(x):
    # Numerically-stable softplus: max(x,0) + log1p(exp(-|x|))  (EUP-friendly).
    return jnp.maximum(x, 0.0) + jnp.log(1.0 + jnp.exp(-jnp.abs(x)))


def _cond_mlp_kernel(x_ref, y_ref, emb_ref,
                     w1_ref, b1_ref, w2_ref, b2_ref,
                     w3_ref, b3_ref, w4_ref, b4_ref,
                     o_ref):
    f32 = jnp.float32
    bf16 = jnp.bfloat16
    bb = x_ref.shape[0]
    n_steps = emb_ref.shape[0]

    # --- gammas: one_hot(y) @ [embed1 | embed2 | embed3]  (tiny MXU op) -----
    y_col = y_ref[...]                                            # (bb, 1) i32
    steps = jax.lax.broadcasted_iota(jnp.int32, (bb, n_steps), 1)  # (bb, n_steps)
    onehot = (steps == y_col).astype(f32)
    gam = jnp.dot(onehot, emb_ref[...], preferred_element_type=f32)  # (bb, 3H)
    g1 = gam[:, 0 * HIDDEN:1 * HIDDEN]
    g2 = gam[:, 1 * HIDDEN:2 * HIDDEN]
    g3 = gam[:, 2 * HIDDEN:3 * HIDDEN]

    # --- 3x ConditionalLinear + softplus, final Linear ----------------------
    x16 = x_ref[...].astype(bf16)
    h = jnp.dot(x16, w1_ref[...], preferred_element_type=f32) + b1_ref[...]
    h = _softplus(g1 * h)

    h = jnp.dot(h.astype(bf16), w2_ref[...], preferred_element_type=f32) + b2_ref[...]
    h = _softplus(g2 * h)

    h = jnp.dot(h.astype(bf16), w3_ref[...], preferred_element_type=f32) + b3_ref[...]
    h = _softplus(g3 * h)

    out = jnp.dot(h.astype(bf16), w4_ref[...], preferred_element_type=f32) + b4_ref[...]
    o_ref[...] = out.astype(o_ref.dtype)


def prepare_params(params):
    """One-time layout plumbing: transposes, bf16 cast, lane padding, concat."""
    out_sz = params["w4"].shape[0]
    out_pad = ((out_sz + 127) // 128) * 128  # lane-dense output stores

    w4t = params["w4"].T                                   # (128, out_sz)
    b4 = params["b4"]
    if out_pad != out_sz:
        w4t = jnp.pad(w4t, ((0, 0), (0, out_pad - out_sz)))
        b4 = jnp.pad(b4, (0, out_pad - out_sz))

    emb = jnp.concatenate(
        [params["embed1"], params["embed2"], params["embed3"]], axis=1)  # (n_steps, 3H)

    return dict(
        w1t=params["w1"].T.astype(jnp.bfloat16),           # (in_sz, 128)
        w2t=params["w2"].T.astype(jnp.bfloat16),           # (128, 128)
        w3t=params["w3"].T.astype(jnp.bfloat16),           # (128, 128)
        w4t=w4t.astype(jnp.bfloat16),                      # (128, out_pad)
        b1=params["b1"].reshape(1, HIDDEN).astype(jnp.float32),
        b2=params["b2"].reshape(1, HIDDEN).astype(jnp.float32),
        b3=params["b3"].reshape(1, HIDDEN).astype(jnp.float32),
        b4=b4.reshape(1, out_pad).astype(jnp.float32),
        emb=emb.astype(jnp.float32),
        in_sz=int(params["w1"].shape[1]),
        out_sz=int(out_sz),
        out_pad=int(out_pad),
    )


def _pick_block(batch, max_block=512):
    """Large batch tiles (amortize per-step overhead / fill MXU), multiple of 8,
    but keep the parallel grid >= 2 steps when possible (v7x has 2 TCs)."""
    b8 = ((batch + 7) // 8) * 8
    if b8 <= 128:
        return b8
    bb = min(max_block, b8)
    if b8 <= bb:                       # would collapse to a 1-step grid
        bb = max(128, ((b8 // 2 + 7) // 8) * 8)
    return bb


def conditional_model_forward(prepared, x, y, cond=None, *, max_block=512):
    """Fused ConditionalModel forward as one Pallas call (cond_model=None path)."""
    # TODO(synk): cond_model==True branch (pretrained torchvision SqueezeNet
    # feature extractor + Resize/Pad preprocessing) has no self-contained
    # Pallas equivalent; `cond` is ignored as in the cond_model=None path.
    del cond

    B, in_sz = x.shape
    assert in_sz == prepared["in_sz"]
    out_sz, out_pad = prepared["out_sz"], prepared["out_pad"]
    n_steps = prepared["emb"].shape[0]

    bb = _pick_block(B, max_block)
    pad_b = (-B) % bb
    y2d = y.astype(jnp.int32).reshape(B, 1)
    if pad_b:
        x = jnp.pad(x, ((0, pad_b), (0, 0)))
        y2d = jnp.pad(y2d, ((0, pad_b), (0, 0)))
    Bp = B + pad_b
    grid = (Bp // bb,)

    def row_spec(shape):    # batch-tiled operands
        return pl.BlockSpec(shape, lambda i: (i, 0))

    def const_spec(shape):  # VMEM-resident weights / biases / embed table
        return pl.BlockSpec(shape, lambda i: (0, 0))

    out2 = pl.pallas_call(
        _cond_mlp_kernel,
        out_shape=jax.ShapeDtypeStruct((Bp, out_pad), x.dtype),
        grid=grid,
        in_specs=[
            row_spec((bb, in_sz)),               # x
            row_spec((bb, 1)),                   # y (int32 column)
            const_spec((n_steps, 3 * HIDDEN)),   # [embed1|embed2|embed3]
            const_spec((in_sz, HIDDEN)),         # W1^T (bf16)
            const_spec((1, HIDDEN)),             # b1
            const_spec((HIDDEN, HIDDEN)),        # W2^T (bf16)
            const_spec((1, HIDDEN)),             # b2
            const_spec((HIDDEN, HIDDEN)),        # W3^T (bf16)
            const_spec((1, HIDDEN)),             # b3
            const_spec((HIDDEN, out_pad)),       # W4^T (bf16, lane-padded)
            const_spec((1, out_pad)),            # b4 (lane-padded)
        ],
        out_specs=row_spec((bb, out_pad)),
        compiler_params=pltpu.CompilerParams(
            dimension_semantics=("parallel",),
        ),
    )(x, y2d, prepared["emb"],
      prepared["w1t"], prepared["b1"], prepared["w2t"], prepared["b2"],
      prepared["w3t"], prepared["b3"], prepared["w4t"], prepared["b4"])

    return out2[:B, :out_sz]


def reference_forward(params, x, y):
    """Pure-JAX reference of the same forward (full-precision f32 matmuls)."""
    hp = jax.lax.Precision.HIGHEST

    def cond_lin(h, w, b, emb):
        out = jnp.dot(h, w.T, precision=hp) + b
        return emb[y] * out  # gamma.view(-1, num_out) * out

    h = _softplus(cond_lin(x, params["w1"], params["b1"], params["embed1"]))
    h = _softplus(cond_lin(h, params["w2"], params["b2"], params["embed2"]))
    h = _softplus(cond_lin(h, params["w3"], params["b3"], params["embed3"]))
    return jnp.dot(h, params["w4"].T, precision=hp) + params["b4"]


def init_params(key, n_steps, in_sz):
    ks = jax.random.split(key, 11)

    def linear(kw, kb, fan_in, fan_out):
        bound = 1.0 / (fan_in ** 0.5)
        w = jax.random.uniform(kw, (fan_out, fan_in), jnp.float32, -bound, bound)
        b = jax.random.uniform(kb, (fan_out,), jnp.float32, -bound, bound)
        return w, b

    w1, b1 = linear(ks[0], ks[1], in_sz, HIDDEN)
    w2, b2 = linear(ks[2], ks[3], HIDDEN, HIDDEN)
    w3, b3 = linear(ks[4], ks[5], HIDDEN, HIDDEN)
    w4, b4 = linear(ks[6], ks[7], HIDDEN, in_sz)
    # nn.Embedding weights initialized with uniform_() as in the module.
    e1 = jax.random.uniform(ks[8], (n_steps, HIDDEN), jnp.float32)
    e2 = jax.random.uniform(ks[9], (n_steps, HIDDEN), jnp.float32)
    e3 = jax.random.uniform(ks[10], (n_steps, HIDDEN), jnp.float32)
    return dict(w1=w1, b1=b1, w2=w2, b2=b2, w3=w3, b3=b3, w4=w4, b4=b4,
                embed1=e1, embed2=e2, embed3=e3)


if __name__ == "__main__":
    key = jax.random.PRNGKey(0)
    n_steps, in_sz, batch = 8, 32, 256   # cond_model=None -> cond_sz = 0

    kp, kx, ky = jax.random.split(key, 3)
    params = init_params(kp, n_steps, in_sz)
    x = jax.random.normal(kx, (batch, in_sz), dtype=jnp.float32)
    y = jax.random.randint(ky, (batch,), 0, n_steps, dtype=jnp.int32)

    prepared = prepare_params(params)   # one-time layout plumbing
    out = conditional_model_forward(prepared, x, y, cond=None)
    out = jax.block_until_ready(out)

    ref = reference_forward(params, x, y)
    assert out.shape == (batch, in_sz) and out.dtype == x.dtype
    # Tolerance accounts for bf16 MXU inputs (f32 accumulation) vs f32 HIGHEST ref.
    assert jnp.allclose(out, ref, atol=2e-2, rtol=2e-2), float(
        jnp.max(jnp.abs(out - ref)))

    print("KERNEL_OK")
</pallas_src>

<mosaic_0001>
module attributes {stable_mosaic.version = 11 : i64} {
  func.func @_cond_mlp_kernel(%arg0: i32, %arg1: memref<128x32xf32, #tpu.memory_space<vmem>>, %arg2: memref<128x1xi32, #tpu.memory_space<vmem>>, %arg3: memref<8x384xf32, #tpu.memory_space<vmem>>, %arg4: memref<32x128xbf16, #tpu.memory_space<vmem>>, %arg5: memref<1x128xf32, #tpu.memory_space<vmem>>, %arg6: memref<128x128xbf16, #tpu.memory_space<vmem>>, %arg7: memref<1x128xf32, #tpu.memory_space<vmem>>, %arg8: memref<128x128xbf16, #tpu.memory_space<vmem>>, %arg9: memref<1x128xf32, #tpu.memory_space<vmem>>, %arg10: memref<128x128xbf16, #tpu.memory_space<vmem>>, %arg11: memref<1x128xf32, #tpu.memory_space<vmem>>, %arg12: memref<128x128xf32, #tpu.memory_space<vmem>>) attributes {dimension_semantics = [#tpu.dimension_semantics<parallel>], iteration_bounds = array<i64: 2>, scalar_prefetch = 0 : i64, scratch_operands = 0 : i64, tpu.core_type = #tpu.core_type<tc>, window_params = [{transform_indices = @transform_0, window_bounds = array<i64: 128, 32>}, {transform_indices = @transform_1, window_bounds = array<i64: 128, 1>}, {pipeline_mode = #tpu.pipeline_mode<synchronous>, transform_indices = @transform_2, window_bounds = array<i64: 8, 384>}, {pipeline_mode = #tpu.pipeline_mode<synchronous>, transform_indices = @transform_3, window_bounds = array<i64: 32, 128>}, {pipeline_mode = #tpu.pipeline_mode<synchronous>, transform_indices = @transform_4, window_bounds = array<i64: 1, 128>}, {pipeline_mode = #tpu.pipeline_mode<synchronous>, transform_indices = @transform_5, window_bounds = array<i64: 128, 128>}, {pipeline_mode = #tpu.pipeline_mode<synchronous>, transform_indices = @transform_6, window_bounds = array<i64: 1, 128>}, {pipeline_mode = #tpu.pipeline_mode<synchronous>, transform_indices = @transform_7, window_bounds = array<i64: 128, 128>}, {pipeline_mode = #tpu.pipeline_mode<synchronous>, transform_indices = @transform_8, window_bounds = array<i64: 1, 128>}, {pipeline_mode = #tpu.pipeline_mode<synchronous>, transform_indices = @transform_9, window_bounds = array<i64: 128, 128>}, {pipeline_mode = #tpu.pipeline_mode<synchronous>, transform_indices = @transform_10, window_bounds = array<i64: 1, 128>}, {transform_indices = @transform_11, window_bounds = array<i64: 128, 128>}]} {
    %c0 = arith.constant 0 : index
    %c0_0 = arith.constant 0 : index
    %0 = vector.load %arg2[%c0, %c0_0] : memref<128x1xi32, #tpu.memory_space<vmem>>, vector<128x1xi32>
    %1 = tpu.iota {dimensions = array<i32: 1>} : vector<128x8xi32>
    %2 = vector.broadcast %0 : vector<128x1xi32> to vector<128x8xi32>
    %3 = arith.cmpi eq, %1, %2 : vector<128x8xi32>
    %4 = arith.extui %3 : vector<128x8xi1> to vector<128x8xi32>
    %5 = arith.sitofp %4 : vector<128x8xi32> to vector<128x8xf32>
    %c0_1 = arith.constant 0 : index
    %c0_2 = arith.constant 0 : index
    %6 = vector.load %arg3[%c0_1, %c0_2] : memref<8x384xf32, #tpu.memory_space<vmem>>, vector<8x384xf32>
    %cst = arith.constant dense<0.000000e+00> : vector<128x384xf32>
    %7 = tpu.matmul %5, %6, %cst {dimension_numbers = #tpu.dot_dimension_numbers<[1], [0], [0], [1], [0, 0, 1, 1], [], []>} : vector<128x8xf32>, vector<8x384xf32>, vector<128x384xf32> -> vector<128x384xf32>
    %8 = vector.extract_strided_slice %7 {offsets = [0, 0], sizes = [128, 128], strides = [1, 1]} : vector<128x384xf32> to vector<128x128xf32>
    %9 = vector.extract_strided_slice %7 {offsets = [0, 128], sizes = [128, 128], strides = [1, 1]} : vector<128x384xf32> to vector<128x128xf32>
    %10 = vector.extract_strided_slice %7 {offsets = [0, 256], sizes = [128, 128], strides = [1, 1]} : vector<128x384xf32> to vector<128x128xf32>
    %c0_3 = arith.constant 0 : index
    %c0_4 = arith.constant 0 : index
    %11 = vector.load %arg1[%c0_3, %c0_4] : memref<128x32xf32, #tpu.memory_space<vmem>>, vector<128x32xf32>
    %12 = arith.truncf %11 : vector<128x32xf32> to vector<128x32xbf16>
    %c0_5 = arith.constant 0 : index
    %c0_6 = arith.constant 0 : index
    %13 = vector.load %arg4[%c0_5, %c0_6] : memref<32x128xbf16, #tpu.memory_space<vmem>>, vector<32x128xbf16>
    %cst_7 = arith.constant dense<0.000000e+00> : vector<128x128xf32>
    %14 = tpu.matmul %12, %13, %cst_7 {dimension_numbers = #tpu.dot_dimension_numbers<[1], [0], [0], [1], [0, 0, 1, 1], [], []>} : vector<128x32xbf16>, vector<32x128xbf16>, vector<128x128xf32> -> vector<128x128xf32>
    %c0_8 = arith.constant 0 : index
    %c0_9 = arith.constant 0 : index
    %15 = vector.load %arg5[%c0_8, %c0_9] : memref<1x128xf32, #tpu.memory_space<vmem>>, vector<1x128xf32>
    %16 = vector.broadcast %15 : vector<1x128xf32> to vector<128x128xf32>
    %17 = arith.addf %14, %16 : vector<128x128xf32>
    %18 = arith.mulf %8, %17 : vector<128x128xf32>
    %cst_10 = arith.constant 0.000000e+00 : f32
    %19 = vector.broadcast %cst_10 : f32 to vector<128x128xf32>
    %20 = arith.maximumf %18, %19 : vector<128x128xf32>
    %21 = math.absf %18 : vector<128x128xf32>
    %cst_11 = arith.constant 0.000000e+00 : f32
    %22 = vector.broadcast %cst_11 : f32 to vector<128x128xf32>
    %23 = arith.subf %22, %21 : vector<128x128xf32>
    %24 = math.exp %23 : vector<128x128xf32>
    %cst_12 = arith.constant 1.000000e+00 : f32
    %25 = vector.broadcast %cst_12 : f32 to vector<128x128xf32>
    %26 = arith.addf %25, %24 : vector<128x128xf32>
    %27 = math.log %26 : vector<128x128xf32>
    %28 = arith.addf %20, %27 : vector<128x128xf32>
    %29 = arith.truncf %28 : vector<128x128xf32> to vector<128x128xbf16>
    %c0_13 = arith.constant 0 : index
    %c0_14 = arith.constant 0 : index
    %30 = vector.load %arg6[%c0_13, %c0_14] : memref<128x128xbf16, #tpu.memory_space<vmem>>, vector<128x128xbf16>
    %cst_15 = arith.constant dense<0.000000e+00> : vector<128x128xf32>
    %31 = tpu.matmul %29, %30, %cst_15 {dimension_numbers = #tpu.dot_dimension_numbers<[1], [0], [0], [1], [0, 0, 1, 1], [], []>} : vector<128x128xbf16>, vector<128x128xbf16>, vector<128x128xf32> -> vector<128x128xf32>
    %c0_16 = arith.constant 0 : index
    %c0_17 = arith.constant 0 : index
    %32 = vector.load %arg7[%c0_16, %c0_17] : memref<1x128xf32, #tpu.memory_space<vmem>>, vector<1x128xf32>
    %33 = vector.broadcast %32 : vector<1x128xf32> to vector<128x128xf32>
    %34 = arith.addf %31, %33 : vector<128x128xf32>
    %35 = arith.mulf %9, %34 : vector<128x128xf32>
    %cst_18 = arith.constant 0.000000e+00 : f32
    %36 = vector.broadcast %cst_18 : f32 to vector<128x128xf32>
    %37 = arith.maximumf %35, %36 : vector<128x128xf32>
    %38 = math.absf %35 : vector<128x128xf32>
    %cst_19 = arith.constant 0.000000e+00 : f32
    %39 = vector.broadcast %cst_19 : f32 to vector<128x128xf32>
    %40 = arith.subf %39, %38 : vector<128x128xf32>
    %41 = math.exp %40 : vector<128x128xf32>
    %cst_20 = arith.constant 1.000000e+00 : f32
    %42 = vector.broadcast %cst_20 : f32 to vector<128x128xf32>
    %43 = arith.addf %42, %41 : vector<128x128xf32>
    %44 = math.log %43 : vector<128x128xf32>
    %45 = arith.addf %37, %44 : vector<128x128xf32>
    %46 = arith.truncf %45 : vector<128x128xf32> to vector<128x128xbf16>
    %c0_21 = arith.constant 0 : index
    %c0_22 = arith.constant 0 : index
    %47 = vector.load %arg8[%c0_21, %c0_22] : memref<128x128xbf16, #tpu.memory_space<vmem>>, vector<128x128xbf16>
    %cst_23 = arith.constant dense<0.000000e+00> : vector<128x128xf32>
    %48 = tpu.matmul %46, %47, %cst_23 {dimension_numbers = #tpu.dot_dimension_numbers<[1], [0], [0], [1], [0, 0, 1, 1], [], []>} : vector<128x128xbf16>, vector<128x128xbf16>, vector<128x128xf32> -> vector<128x128xf32>
    %c0_24 = arith.constant 0 : index
    %c0_25 = arith.constant 0 : index
    %49 = vector.load %arg9[%c0_24, %c0_25] : memref<1x128xf32, #tpu.memory_space<vmem>>, vector<1x128xf32>
    %50 = vector.broadcast %49 : vector<1x128xf32> to vector<128x128xf32>
    %51 = arith.addf %48, %50 : vector<128x128xf32>
    %52 = arith.mulf %10, %51 : vector<128x128xf32>
    %cst_26 = arith.constant 0.000000e+00 : f32
    %53 = vector.broadcast %cst_26 : f32 to vector<128x128xf32>
    %54 = arith.maximumf %52, %53 : vector<128x128xf32>
    %55 = math.absf %52 : vector<128x128xf32>
    %cst_27 = arith.constant 0.000000e+00 : f32
    %56 = vector.broadcast %cst_27 : f32 to vector<128x128xf32>
    %57 = arith.subf %56, %55 : vector<128x128xf32>
    %58 = math.exp %57 : vector<128x128xf32>
    %cst_28 = arith.constant 1.000000e+00 : f32
    %59 = vector.broadcast %cst_28 : f32 to vector<128x128xf32>
    %60 = arith.addf %59, %58 : vector<128x128xf32>
    %61 = math.log %60 : vector<128x128xf32>
    %62 = arith.addf %54, %61 : vector<128x128xf32>
    %63 = arith.truncf %62 : vector<128x128xf32> to vector<128x128xbf16>
    %c0_29 = arith.constant 0 : index
    %c0_30 = arith.constant 0 : index
    %64 = vector.load %arg10[%c0_29, %c0_30] : memref<128x128xbf16, #tpu.memory_space<vmem>>, vector<128x128xbf16>
    %cst_31 = arith.constant dense<0.000000e+00> : vector<128x128xf32>
    %65 = tpu.matmul %63, %64, %cst_31 {dimension_numbers = #tpu.dot_dimension_numbers<[1], [0], [0], [1], [0, 0, 1, 1], [], []>} : vector<128x128xbf16>, vector<128x128xbf16>, vector<128x128xf32> -> vector<128x128xf32>
    %c0_32 = arith.constant 0 : index
    %c0_33 = arith.constant 0 : index
    %66 = vector.load %arg11[%c0_32, %c0_33] : memref<1x128xf32, #tpu.memory_space<vmem>>, vector<1x128xf32>
    %67 = vector.broadcast %66 : vector<1x128xf32> to vector<128x128xf32>
    %68 = arith.addf %65, %67 : vector<128x128xf32>
    %c0_34 = arith.constant 0 : index
    %c0_35 = arith.constant 0 : index
    %69 = vector.load %arg12[%c0_34, %c0_35] : memref<128x128xf32, #tpu.memory_space<vmem>>, vector<128x128xf32>
    tpu.vector_store %arg12[%c0_34, %c0_35], %68 {strides = array<i32>} : memref<128x128xf32, #tpu.memory_space<vmem>>, vector<128x128xf32>,
    return
  }
  func.func @transform_0(%arg0: i32) -> (i32, i32) {
    %c0_i32 = arith.constant 0 : i32
    %c0_i32_0 = arith.constant 0 : i32
    return %arg0, %c0_i32 : i32, i32
  }
  func.func @transform_1(%arg0: i32) -> (i32, i32) {
    %c0_i32 = arith.constant 0 : i32
    %c0_i32_0 = arith.constant 0 : i32
    return %arg0, %c0_i32 : i32, i32
  }
  func.func @transform_2(%arg0: i32) -> (i32, i32) {
    %c0_i32 = arith.constant 0 : i32
    %c0_i32_0 = arith.constant 0 : i32
    %c0_i32_1 = arith.constant 0 : i32
    return %c0_i32, %c0_i32_0 : i32, i32
  }
  func.func @transform_3(%arg0: i32) -> (i32, i32) {
    %c0_i32 = arith.constant 0 : i32
    %c0_i32_0 = arith.constant 0 : i32
    %c0_i32_1 = arith.constant 0 : i32
    return %c0_i32, %c0_i32_0 : i32, i32
  }
  func.func @transform_4(%arg0: i32) -> (i32, i32) {
    %c0_i32 = arith.constant 0 : i32
    %c0_i32_0 = arith.constant 0 : i32
    %c0_i32_1 = arith.constant 0 : i32
    return %c0_i32, %c0_i32_0 : i32, i32
  }
  func.func @transform_5(%arg0: i32) -> (i32, i32) {
    %c0_i32 = arith.constant 0 : i32
    %c0_i32_0 = arith.constant 0 : i32
    %c0_i32_1 = arith.constant 0 : i32
    return %c0_i32, %c0_i32_0 : i32, i32
  }
  func.func @transform_6(%arg0: i32) -> (i32, i32) {
    %c0_i32 = arith.constant 0 : i32
    %c0_i32_0 = arith.constant 0 : i32
    %c0_i32_1 = arith.constant 0 : i32
    return %c0_i32, %c0_i32_0 : i32, i32
  }
  func.func @transform_7(%arg0: i32) -> (i32, i32) {
    %c0_i32 = arith.constant 0 : i32
    %c0_i32_0 = arith.constant 0 : i32
    %c0_i32_1 = arith.constant 0 : i32
    return %c0_i32, %c0_i32_0 : i32, i32
  }
  func.func @transform_8(%arg0: i32) -> (i32, i32) {
    %c0_i32 = arith.constant 0 : i32
    %c0_i32_0 = arith.constant 0 : i32
    %c0_i32_1 = arith.constant 0 : i32
    return %c0_i32, %c0_i32_0 : i32, i32
  }
  func.func @transform_9(%arg0: i32) -> (i32, i32) {
    %c0_i32 = arith.constant 0 : i32
    %c0_i32_0 = arith.constant 0 : i32
    %c0_i32_1 = arith.constant 0 : i32
    return %c0_i32, %c0_i32_0 : i32, i32
  }
  func.func @transform_10(%arg0: i32) -> (i32, i32) {
    %c0_i32 = arith.constant 0 : i32
    %c0_i32_0 = arith.constant 0 : i32
    %c0_i32_1 = arith.constant 0 : i32
    return %c0_i32, %c0_i32_0 : i32, i32
  }
  func.func @transform_11(%arg0: i32) -> (i32, i32) {
    %c0_i32 = arith.constant 0 : i32
    %c0_i32_0 = arith.constant 0 : i32
    return %arg0, %c0_i32 : i32, i32
  }
}

</mosaic_0001>

<llo_original>
// kernel: tpu_custom_call.1
$region0: #{tpu_custom_call.1}
  #allocation0 [shape = 'u32[]', space=smem, size = 0x4, offset = 0x4, fixed_abs, tag = 'smem constant byte address 0x4 - core index']
  #allocation1 [shape = 'u32[144,128]{1,0:T(1,128)}', space=vmem, size = 0x12000, scoped, tag = 'internal scratch']
  %s0 = inlined_call_operand.vmem [shape: f32[256,32], index: 0, kind: input, shape index: {}]
  %s1 = inlined_call_operand.vmem [shape: s32[256,1], index: 1, kind: input, shape index: {}]
  %s2 = inlined_call_operand.vmem [shape: f32[8,384], index: 2, kind: input, shape index: {}]
  %s3 = inlined_call_operand.vmem [shape: bf16[32,128], index: 3, kind: input, shape index: {}]
  %s4 = inlined_call_operand.vmem [shape: f32[1,128], index: 4, kind: input, shape index: {}]
  %s5 = inlined_call_operand.vmem [shape: bf16[128,128], index: 5, kind: input, shape index: {}]
  %s6 = inlined_call_operand.vmem [shape: f32[1,128], index: 6, kind: input, shape index: {}]
  %s7 = inlined_call_operand.vmem [shape: bf16[128,128], index: 7, kind: input, shape index: {}]
  %s8 = inlined_call_operand.vmem [shape: f32[1,128], index: 8, kind: input, shape index: {}]
  %s9 = inlined_call_operand.vmem [shape: bf16[128,128], index: 9, kind: input, shape index: {}]
  %s10 = inlined_call_operand.vmem [shape: f32[1,128], index: 10, kind: input, shape index: {}]
  %s11 = inlined_call_operand.hbm [shape: f32[256,128], index: 11, kind: output, shape index: {}]
  %s12 = sld [smem:[#allocation0]]
  $region77: #{tpu_custom_call.1} parent=0
    _
  %s14 = ssub.s32 1, %s12
  %s15 = scalar_select 0, %s14, %s12
  $region1: #{tpu_custom_call.1} parent=0
    #allocation2 [shape = 'u8[131072]{0}', space=vmem, size = 0x20000, scoped, tag = 'output window, operand 0']
    #allocation3 [shape = 's32[2]{0}', space=sflag, size = 0x8, scoped, tag = 'scoped memory for tpu_custom_call.1']
    %16 = vsyncpa [#allocation3], 0
    %s17 = scalar_lea.sflag [#allocation3], 1
    %18 = vsyncpa %s17, 0
    loop: start=0, step=1, limit=4
    $region2: #{tpu_custom_call.1} parent=1 // loop_pre_header
      _
    $region3: #{tpu_custom_call.1} parent=1 // loop_header
      %s20 = sphi 0, %s24
      %p21 = scmp.ge.s32.totalorder %s20, 4
      %s30 = sphi 0, %s32
      %s33 = sphi 0, %s30
      %s34 = sphi 0, %s33
      %s50 = sphi 0, %s34
      %s56 = sphi 0, %s58
      %s59 = sphi 0, %s56
      %s60 = sphi 0, %s59
      %s76 = sphi 0, %s60
      %s80 = sphi 0, %s80
      %s82 = sphi 0, %s80
      %s83 = sphi 0, %s82
      %s97 = sphi 0, %s83
      %s101 = sphi 0, %s101
      %s103 = sphi 0, %s101
      %s104 = sphi 0, %s103
      %s118 = sphi 0, %s104
      %s122 = sphi 0, %s122
      %s124 = sphi 0, %s122
      %s125 = sphi 0, %s124
      %s139 = sphi 0, %s125
      %s143 = sphi 0, %s143
      %s145 = sphi 0, %s143
      %s146 = sphi 0, %s145
      %s160 = sphi 0, %s146
      %s164 = sphi 0, %s164
      %s166 = sphi 0, %s164
      %s167 = sphi 0, %s166
      %s181 = sphi 0, %s167
      %s185 = sphi 0, %s185
      %s187 = sphi 0, %s185
      %s188 = sphi 0, %s187
      %s202 = sphi 0, %s188
      %s206 = sphi 0, %s206
      %s208 = sphi 0, %s206
      %s209 = sphi 0, %s208
      %s223 = sphi 0, %s209
      %s227 = sphi 0, %s227
      %s229 = sphi 0, %s227
      %s230 = sphi 0, %s229
      %s244 = sphi 0, %s230
      %s248 = sphi 0, %s248
      %s250 = sphi 0, %s248
      %s251 = sphi 0, %s250
      %s265 = sphi 0, %s251
      %s271 = sphi 0, %s273
      %s274 = sphi 0, %s271
      %s275 = sphi 0, %s274
      %s291 = sphi 0, %s275
    $region4: #{tpu_custom_call.1} parent=1 // loop_header_branch
      %23 = sbr.rel (%p21) target = $region8
    $region5: #{tpu_custom_call.1} parent=1 // loop_body
      %s25 = ssub.s32 %s20, 1
      %s26 = ssub.s32 %s20, 2
      %s27 = sadd.s32 %s20, 1
      %s28 = ssub.s32 %s20, %s27
      %p29 = scmp.eq.s32.totalorder %s28, 0
      %s31 = sadd.s32 %s30, 1
      %s32 = scalar_select %p29, %s30, %s31
      %p35 = pneg %p29
      %p36 = scmp.eq.s32.totalorder %s20, 1
      %p37 = por %p35, %p36
      %p38 = scmp.ne.s32.totalorder %s30, %s33
      %p39 = scmp.eq.s32.totalorder %s20, 0
      %p40 = por %p38, %p39
      %p41 = scmp.ne.s32.totalorder %s30, %s33
      %p42 = scmp.eq.s32.totalorder %s25, 1
      %p43 = por %p41, %p42
      %p44 = scmp.ne.s32.totalorder %s33, %s34
      %p45 = scmp.eq.s32.totalorder %s25, 0
      %p46 = por %p44, %p45
      %p47 = scmp.ne.s32.totalorder %s33, %s34
      %p48 = scmp.eq.s32.totalorder %s26, 1
      %p49 = por %p47, %p48
      %p51 = scmp.ne.s32.totalorder %s34, %s50
      %p52 = scmp.eq.s32.totalorder %s26, 0
      %p53 = por %p51, %p52
      %s54 = ssub.s32 %s20, %s27
      %p55 = scmp.eq.s32.totalorder %s54, 0
      %s57 = sadd.s32 %s56, 1
      %s58 = scalar_select %p55, %s56, %s57
      %p61 = pneg %p55
      %p62 = scmp.eq.s32.totalorder %s20, 1
      %p63 = por %p61, %p62
      %p64 = scmp.ne.s32.totalorder %s56, %s59
      %p65 = scmp.eq.s32.totalorder %s20, 0
      %p66 = por %p64, %p65
      %p67 = scmp.ne.s32.totalorder %s56, %s59
      %p68 = scmp.eq.s32.totalorder %s25, 1
      %p69 = por %p67, %p68
      %p70 = scmp.ne.s32.totalorder %s59, %s60
      %p71 = scmp.eq.s32.totalorder %s25, 0
      %p72 = por %p70, %p71
      %p73 = scmp.ne.s32.totalorder %s59, %s60
      %p74 = scmp.eq.s32.totalorder %s26, 1
      %p75 = por %p73, %p74
      %p77 = scmp.ne.s32.totalorder %s60, %s76
      %p78 = scmp.eq.s32.totalorder %s26, 0
      %p79 = por %p77, %p78
      %s81 = sadd.s32 %s80, 1
      %p84 = scmp.eq.s32.totalorder %s20, 1
      %p85 = scmp.ne.s32.totalorder %s80, %s82
      %p86 = scmp.eq.s32.totalorder %s20, 0
      %p87 = por %p85, %p86
      %p88 = scmp.ne.s32.totalorder %s80, %s82
      %p89 = scmp.eq.s32.totalorder %s25, 1
      %p90 = por %p88, %p89
      %p91 = scmp.ne.s32.totalorder %s82, %s83
      %p92 = scmp.eq.s32.totalorder %s25, 0
      %p93 = por %p91, %p92
      %p94 = scmp.ne.s32.totalorder %s82, %s83
      %p95 = scmp.eq.s32.totalorder %s26, 1
      %p96 = por %p94, %p95
      %p98 = scmp.ne.s32.totalorder %s83, %s97
      %p99 = scmp.eq.s32.totalorder %s26, 0
      %p100 = por %p98, %p99
      %s102 = sadd.s32 %s101, 1
      %p105 = scmp.eq.s32.totalorder %s20, 1
      %p106 = scmp.ne.s32.totalorder %s101, %s103
      %p107 = scmp.eq.s32.totalorder %s20, 0
      %p108 = por %p106, %p107
      %p109 = scmp.ne.s32.totalorder %s101, %s103
      %p110 = scmp.eq.s32.totalorder %s25, 1
      %p111 = por %p109, %p110
      %p112 = scmp.ne.s32.totalorder %s103, %s104
      %p113 = scmp.eq.s32.totalorder %s25, 0
      %p114 = por %p112, %p113
      %p115 = scmp.ne.s32.totalorder %s103, %s104
      %p116 = scmp.eq.s32.totalorder %s26, 1
      %p117 = por %p115, %p116
      %p119 = scmp.ne.s32.totalorder %s104, %s118
      %p120 = scmp.eq.s32.totalorder %s26, 0
      %p121 = por %p119, %p120
      %s123 = sadd.s32 %s122, 1
      %p126 = scmp.eq.s32.totalorder %s20, 1
      %p127 = scmp.ne.s32.totalorder %s122, %s124
      %p128 = scmp.eq.s32.totalorder %s20, 0
      %p129 = por %p127, %p128
      %p130 = scmp.ne.s32.totalorder %s122, %s124
      %p131 = scmp.eq.s32.totalorder %s25, 1
      %p132 = por %p130, %p131
      %p133 = scmp.ne.s32.totalorder %s124, %s125
      %p134 = scmp.eq.s32.totalorder %s25, 0
      %p135 = por %p133, %p134
      %p136 = scmp.ne.s32.totalorder %s124, %s125
      %p137 = scmp.eq.s32.totalorder %s26, 1
      %p138 = por %p136, %p137
      %p140 = scmp.ne.s32.totalorder %s125, %s139
      %p141 = scmp.eq.s32.totalorder %s26, 0
      %p142 = por %p140, %p141
      %s144 = sadd.s32 %s143, 1
      %p147 = scmp.eq.s32.totalorder %s20, 1
      %p148 = scmp.ne.s32.totalorder %s143, %s145
      %p149 = scmp.eq.s32.totalorder %s20, 0
      %p150 = por %p148, %p149
      %p151 = scmp.ne.s32.totalorder %s143, %s145
      %p152 = scmp.eq.s32.totalorder %s25, 1
      %p153 = por %p151, %p152
      %p154 = scmp.ne.s32.totalorder %s145, %s146
      %p155 = scmp.eq.s32.totalorder %s25, 0
      %p156 = por %p154, %p155
      %p157 = scmp.ne.s32.totalorder %s145, %s146
      %p158 = scmp.eq.s32.totalorder %s26, 1
      %p159 = por %p157, %p158
      %p161 = scmp.ne.s32.totalorder %s146, %s160
      %p162 = scmp.eq.s32.totalorder %s26, 0
      %p163 = por %p161, %p162
      %s165 = sadd.s32 %s164, 1
      %p168 = scmp.eq.s32.totalorder %s20, 1
      %p169 = scmp.ne.s32.totalorder %s164, %s166
      %p170 = scmp.eq.s32.totalorder %s20, 0
      %p171 = por %p169, %p170
      %p172 = scmp.ne.s32.totalorder %s164, %s166
      %p173 = scmp.eq.s32.totalorder %s25, 1
      %p174 = por %p172, %p173
      %p175 = scmp.ne.s32.totalorder %s166, %s167
      %p176 = scmp.eq.s32.totalorder %s25, 0
      %p177 = por %p175, %p176
      %p178 = scmp.ne.s32.totalorder %s166, %s167
      %p179 = scmp.eq.s32.totalorder %s26, 1
      %p180 = por %p178, %p179
      %p182 = scmp.ne.s32.totalorder %s167, %s181
      %p183 = scmp.eq.s32.totalorder %s26, 0
      %p184 = por %p182, %p183
      %s186 = sadd.s32 %s185, 1
      %p189 = scmp.eq.s32.totalorder %s20, 1
      %p190 = scmp.ne.s32.totalorder %s185, %s187
      %p191 = scmp.eq.s32.totalorder %s20, 0
      %p192 = por %p190, %p191
      %p193 = scmp.ne.s32.totalorder %s185, %s187
      %p194 = scmp.eq.s32.totalorder %s25, 1
      %p195 = por %p193, %p194
      %p196 = scmp.ne.s32.totalorder %s187, %s188
      %p197 = scmp.eq.s32.totalorder %s25, 0
      %p198 = por %p196, %p197
      %p199 = scmp.ne.s32.totalorder %s187, %s188
      %p200 = scmp.eq.s32.totalorder %s26, 1
      %p201 = por %p199, %p200
      %p203 = scmp.ne.s32.totalorder %s188, %s202
      %p204 = scmp.eq.s32.totalorder %s26, 0
      %p205 = por %p203, %p204
      %s207 = sadd.s32 %s206, 1
      %p210 = scmp.eq.s32.totalorder %s20, 1
      %p211 = scmp.ne.s32.totalorder %s206, %s208
      %p212 = scmp.eq.s32.totalorder %s20, 0
      %p213 = por %p211, %p212
      %p214 = scmp.ne.s32.totalorder %s206, %s208
      %p215 = scmp.eq.s32.totalorder %s25, 1
      %p216 = por %p214, %p215
      %p217 = scmp.ne.s32.totalorder %s208, %s209
      %p218 = scmp.eq.s32.totalorder %s25, 0
      %p219 = por %p217, %p218
      %p220 = scmp.ne.s32.totalorder %s208, %s209
      %p221 = scmp.eq.s32.totalorder %s26, 1
      %p222 = por %p220, %p221
      %p224 = scmp.ne.s32.totalorder %s209, %s223
      %p225 = scmp.eq.s32.totalorder %s26, 0
      %p226 = por %p224, %p225
      %s228 = sadd.s32 %s227, 1
      %p231 = scmp.eq.s32.totalorder %s20, 1
      %p232 = scmp.ne.s32.totalorder %s227, %s229
      %p233 = scmp.eq.s32.totalorder %s20, 0
      %p234 = por %p232, %p233
      %p235 = scmp.ne.s32.totalorder %s227, %s229
      %p236 = scmp.eq.s32.totalorder %s25, 1
      %p237 = por %p235, %p236
      %p238 = scmp.ne.s32.totalorder %s229, %s230
      %p239 = scmp.eq.s32.totalorder %s25, 0
      %p240 = por %p238, %p239
      %p241 = scmp.ne.s32.totalorder %s229, %s230
      %p242 = scmp.eq.s32.totalorder %s26, 1
      %p243 = por %p241, %p242
      %p245 = scmp.ne.s32.totalorder %s230, %s244
      %p246 = scmp.eq.s32.totalorder %s26, 0
      %p247 = por %p245, %p246
      %s249 = sadd.s32 %s248, 1
      %p252 = scmp.eq.s32.totalorder %s20, 1
      %p253 = scmp.ne.s32.totalorder %s248, %s250
      %p254 = scmp.eq.s32.totalorder %s20, 0
      %p255 = por %p253, %p254
      %p256 = scmp.ne.s32.totalorder %s248, %s250
      %p257 = scmp.eq.s32.totalorder %s25, 1
      %p258 = por %p256, %p257
      %p259 = scmp.ne.s32.totalorder %s250, %s251
      %p260 = scmp.eq.s32.totalorder %s25, 0
      %p261 = por %p259, %p260
      %p262 = scmp.ne.s32.totalorder %s250, %s251
      %p263 = scmp.eq.s32.totalorder %s26, 1
      %p264 = por %p262, %p263
      %p266 = scmp.ne.s32.totalorder %s251, %s265
      %p267 = scmp.eq.s32.totalorder %s26, 0
      %p268 = por %p266, %p267
      %s269 = ssub.s32 %s20, %s27
      %p270 = scmp.eq.s32.totalorder %s269, 0
      %s272 = sadd.s32 %s271, 1
      %s273 = scalar_select %p270, %s271, %s272
      %p276 = pneg %p270
      %p277 = scmp.eq.s32.totalorder %s20, 1
      %p278 = por %p276, %p277
      %p279 = scmp.ne.s32.totalorder %s271, %s274
      %p280 = scmp.eq.s32.totalorder %s20, 0
      %p281 = por %p279, %p280
      %p282 = scmp.ne.s32.totalorder %s271, %s274
      %p283 = scmp.eq.s32.totalorder %s25, 1
      %p284 = por %p282, %p283
      %p285 = scmp.ne.s32.totalorder %s274, %s275
      %p286 = scmp.eq.s32.totalorder %s25, 0
      %p287 = por %p285, %p286
      %p288 = scmp.ne.s32.totalorder %s274, %s275
      %p289 = scmp.eq.s32.totalorder %s26, 1
      %p290 = por %p288, %p289
      %p292 = scmp.ne.s32.totalorder %s275, %s291
      %p293 = scmp.eq.s32.totalorder %s26, 0
      %p294 = por %p292, %p293
      %p295 = scmp.le.s32.totalorder 1, %s20
      %p296 = scmp.lt.s32.totalorder %s20, 3
      %p297 = pnand %p295, %p296
      %p298 = pneg %p297
      // Predicated region
      $region9: #{tpu_custom_call.1} parent=5 // pred_check
        _
      $region10: #{tpu_custom_call.1} parent=5 // pred_check_branch
        %300 = sbr.rel (%p297) target = $region12
      $region11: #{tpu_custom_call.1} parent=5 // pred_region
        %s301 = ssub.s32 %s20, 1
        // Predicated region
        $region13: #{tpu_custom_call.1} parent=11 // pred_check
          %p302 = pneg %p93
        $region14: #{tpu_custom_call.1} parent=11 // pred_check_branch
          %304 = sbr.rel (%p302) target = $region16
        $region15: #{tpu_custom_call.1} parent=11 // pred_region
          _
        $region16: #{tpu_custom_call.1} parent=11 // pred_fallthru
          _
        // Predicated region
        $region17: #{tpu_custom_call.1} parent=11 // pred_check
          %p305 = pneg %p114
        $region18: #{tpu_custom_call.1} parent=11 // pred_check_branch
          %307 = sbr.rel (%p305) target = $region20
        $region19: #{tpu_custom_call.1} parent=11 // pred_region
          _
        $region20: #{tpu_custom_call.1} parent=11 // pred_fallthru
          _
        // Predicated region
        $region21: #{tpu_custom_call.1} parent=11 // pred_check
          %p308 = pneg %p135
        $region22: #{tpu_custom_call.1} parent=11 // pred_check_branch
          %310 = sbr.rel (%p308) target = $region24
        $region23: #{tpu_custom_call.1} parent=11 // pred_region
          _
        $region24: #{tpu_custom_call.1} parent=11 // pred_fallthru
          _
        // Predicated region
        $region25: #{tpu_custom_call.1} parent=11 // pred_check
          %p311 = pneg %p156
        $region26: #{tpu_custom_call.1} parent=11 // pred_check_branch
          %313 = sbr.rel (%p311) target = $region28
        $region27: #{tpu_custom_call.1} parent=11 // pred_region
          _
        $region28: #{tpu_custom_call.1} parent=11 // pred_fallthru
          _
        // Predicated region
        $region29: #{tpu_custom_call.1} parent=11 // pred_check
          %p314 = pneg %p177
        $region30: #{tpu_custom_call.1} parent=11 // pred_check_branch
          %316 = sbr.rel (%p314) target = $region32
        $region31: #{tpu_custom_call.1} parent=11 // pred_region
          _
        $region32: #{tpu_custom_call.1} parent=11 // pred_fallthru
          _
        // Predicated region
        $region33: #{tpu_custom_call.1} parent=11 // pred_check
          %p317 = pneg %p198
        $region34: #{tpu_custom_call.1} parent=11 // pred_check_branch
          %319 = sbr.rel (%p317) target = $region36
        $region35: #{tpu_custom_call.1} parent=11 // pred_region
          _
        $region36: #{tpu_custom_call.1} parent=11 // pred_fallthru
          _
        // Predicated region
        $region37: #{tpu_custom_call.1} parent=11 // pred_check
          %p320 = pneg %p219
        $region38: #{tpu_custom_call.1} parent=11 // pred_check_branch
          %322 = sbr.rel (%p320) target = $region40
        $region39: #{tpu_custom_call.1} parent=11 // pred_region
          _
        $region40: #{tpu_custom_call.1} parent=11 // pred_fallthru
          _
        // Predicated region
        $region41: #{tpu_custom_call.1} parent=11 // pred_check
          %p323 = pneg %p240
        $region42: #{tpu_custom_call.1} parent=11 // pred_check_branch
          %325 = sbr.rel (%p323) target = $region44
        $region43: #{tpu_custom_call.1} parent=11 // pred_region
          _
        $region44: #{tpu_custom_call.1} parent=11 // pred_fallthru
          _
        // Predicated region
        $region45: #{tpu_custom_call.1} parent=11 // pred_check
          %p326 = pneg %p261
        $region46: #{tpu_custom_call.1} parent=11 // pred_check_branch
          %328 = sbr.rel (%p326) target = $region48
        $region47: #{tpu_custom_call.1} parent=11 // pred_region
          _
        $region48: #{tpu_custom_call.1} parent=11 // pred_fallthru
          _
      $region12: #{tpu_custom_call.1} parent=5 // pred_fallthru
        _
      %p329 = scmp.lt.s32.totalorder %s20, 2
      // Predicated region
      $region49: #{tpu_custom_call.1} parent=5 // pred_check
        %p330 = pneg %p329
      $region50: #{tpu_custom_call.1} parent=5 // pred_check_branch
        %332 = sbr.rel (%p330) target = $region52
      $region51: #{tpu_custom_call.1} parent=5 // pred_region
        // Predicated region
        $region53: #{tpu_custom_call.1} parent=51 // pred_check
          %p333 = pneg %p40
        $region54: #{tpu_custom_call.1} parent=51 // pred_check_branch
          %335 = sbr.rel (%p333) target = $region56
        $region55: #{tpu_custom_call.1} parent=51 // pred_region
          %s336 = smul.u32 16, %s20
          %p337 = scmp.lt.s32.totalorder %s336, 31
          %s338 = scalar_select %p337, %s336, 31
          %s339 = smul.addr %s338, 8
          %s340 = scalar_lea.vmem %s0, %s339
          %s341 = smul.u32 16, %s20
        $region56: #{tpu_custom_call.1} parent=51 // pred_fallthru
          _
        // Predicated region
        $region57: #{tpu_custom_call.1} parent=51 // pred_check
          %p342 = pneg %p66
        $region58: #{tpu_custom_call.1} parent=51 // pred_check_branch
          %344 = sbr.rel (%p342) target = $region60
        $region59: #{tpu_custom_call.1} parent=51 // pred_region
          %s345 = smul.u32 16, %s20
          %p346 = scmp.lt.s32.totalorder %s345, 31
          %s347 = scalar_select %p346, %s345, 31
          %s348 = smul.addr %s347, 8
          %s349 = scalar_lea.vmem %s1, %s348
          %s350 = smul.u32 16, %s20
        $region60: #{tpu_custom_call.1} parent=51 // pred_fallthru
          _
      $region52: #{tpu_custom_call.1} parent=5 // pred_fallthru
        _
      %p351 = scmp.le.s32.totalorder 1, %s20
      %p352 = scmp.lt.s32.totalorder %s20, 3
      %p353 = pnand %p351, %p352
      %p354 = pneg %p353
      // Predicated region
      $region61: #{tpu_custom_call.1} parent=5 // pred_check
        _
      $region62: #{tpu_custom_call.1} parent=5 // pred_check_branch
        %356 = sbr.rel (%p353) target = $region64
      $region63: #{tpu_custom_call.1} parent=5 // pred_region
        %s357 = ssub.s32 %s20, 1
        %s358 = smul.u32 16, %s25
        %p359 = scmp.lt.s32.totalorder %s358, 31
        %s360 = scalar_select %p359, %s358, 31
        %s361 = smul.addr %s360, 8
        %s362 = scalar_lea.vmem %s0, %s361
        %p363 = pneg %p46
        %p364 = pneg %p43
        %s365 = smul.u32 16, %s25
        %p366 = scmp.lt.s32.totalorder %s365, 31
        %s367 = scalar_select %p366, %s365, 31
        %s368 = smul.addr %s367, 8
        %s369 = scalar_lea.vmem %s1, %s368
        %p370 = pneg %p72
        %p371 = pneg %p69
        %p372 = pneg %p93
        %p373 = pneg %p90
        %p374 = pneg %p114
        %p375 = pneg %p111
        %p376 = pneg %p135
        %p377 = pneg %p132
        %p378 = pneg %p156
        %p379 = pneg %p153
        %p380 = pneg %p177
        %p381 = pneg %p174
        %p382 = pneg %p198
        %p383 = pneg %p195
        %p384 = pneg %p219
        %p385 = pneg %p216
        %p386 = pneg %p240
        %p387 = pneg %p237
        %p388 = pneg %p261
        %p389 = pneg %p258
        %p390 = pneg %p287
        %p391 = pneg %p284
        %s392 = sand.u32 %s274, 1
        %s393 = scalar_lea.sflag [#allocation3], %s392
        %s394 = sand.u32 %s274, 1
        %s395 = smul.addr %s394, 128
        %s396 = scalar_lea.vmem [#allocation2], %s395
        %s397 = smul.u32 16, %s25
        %p398 = scmp.lt.s32.totalorder %s397, 31
        %s399 = scalar_select %p398, %s397, 31
        %s400 = smul.addr %s399, 8
        %s401 = scalar_lea.vmem %s0, %s400
        %s402 = smul.u32 16, %s25
        %s403 = smul.u32 16, %s25
        %p404 = scmp.lt.s32.totalorder %s403, 31
        %s405 = scalar_select %p404, %s403, 31
        %s406 = smul.addr %s405, 8
        %s407 = scalar_lea.vmem %s1, %s406
        %s408 = smul.u32 16, %s25
        %s409 = smul.u32 16, %s25
        %v411 = vld [vmem:[%s407] sm:$0xff]
        %v412 = vld [vmem:[%s407 + $0x8] sm:$0xff]
        %v413 = vld [vmem:[%s407 + $0x10] sm:$0xff]
        %v414 = vld [vmem:[%s407 + $0x18] sm:$0xff]
        %v415 = vld [vmem:[%s407 + $0x20] sm:$0xff]
        %v416 = vld [vmem:[%s407 + $0x28] sm:$0xff]
        %v417 = vld [vmem:[%s407 + $0x30] sm:$0xff]
        %v418 = vld [vmem:[%s407 + $0x38] sm:$0xff]
        %v419 = vld [vmem:[%s407 + $0x40] sm:$0xff]
        %v420 = vld [vmem:[%s407 + $0x48] sm:$0xff]
        %v421 = vld [vmem:[%s407 + $0x50] sm:$0xff]
        %v422 = vld [vmem:[%s407 + $0x58] sm:$0xff]
        %v423 = vld [vmem:[%s407 + $0x60] sm:$0xff]
        %v424 = vld [vmem:[%s407 + $0x68] sm:$0xff]
        %v425 = vld [vmem:[%s407 + $0x70] sm:$0xff]
        %v426 = vld [vmem:[%s407 + $0x78] sm:$0xff]
        %v427 = vlaneseq
        %v428 = vand.u32 %v427, 127
        %429 = vset.pattern.permute.xlu0 0
        %430 = vperm.xlu0 %429, %v411
        %v431 = vpop.permute.xlu0 %430
        %432 = vset.pattern.permute.xlu0 0
        %433 = vperm.xlu0 %432, %v412
        %v434 = vpop.permute.xlu0 %433
        %435 = vset.pattern.permute.xlu0 0
        %436 = vperm.xlu0 %435, %v413
        %v437 = vpop.permute.xlu0 %436
        %438 = vset.pattern.permute.xlu0 0
        %439 = vperm.xlu0 %438, %v414
        %v440 = vpop.permute.xlu0 %439
        %441 = vset.pattern.permute.xlu0 0
        %442 = vperm.xlu0 %441, %v415
        %v443 = vpop.permute.xlu0 %442
        %444 = vset.pattern.permute.xlu0 0
        %445 = vperm.xlu0 %444, %v416
        %v446 = vpop.permute.xlu0 %445
        %447 = vset.pattern.permute.xlu0 0
        %448 = vperm.xlu0 %447, %v417
        %v449 = vpop.permute.xlu0 %448
        %450 = vset.pattern.permute.xlu0 0
        %451 = vperm.xlu0 %450, %v418
        %v452 = vpop.permute.xlu0 %451
        %453 = vset.pattern.permute.xlu0 0
        %454 = vperm.xlu0 %453, %v419
        %v455 = vpop.permute.xlu0 %454
        %456 = vset.pattern.permute.xlu0 0
        %457 = vperm.xlu0 %456, %v420
        %v458 = vpop.permute.xlu0 %457
        %459 = vset.pattern.permute.xlu0 0
        %460 = vperm.xlu0 %459, %v421
        %v461 = vpop.permute.xlu0 %460
        %462 = vset.pattern.permute.xlu0 0
        %463 = vperm.xlu0 %462, %v422
        %v464 = vpop.permute.xlu0 %463
        %465 = vset.pattern.permute.xlu0 0
        %466 = vperm.xlu0 %465, %v423
        %v467 = vpop.permute.xlu0 %466
        %468 = vset.pattern.permute.xlu0 0
        %469 = vperm.xlu0 %468, %v424
        %v470 = vpop.permute.xlu0 %469
        %471 = vset.pattern.permute.xlu0 0
        %472 = vperm.xlu0 %471, %v425
        %v473 = vpop.permute.xlu0 %472
        %474 = vset.pattern.permute.xlu0 0
        %475 = vperm.xlu0 %474, %v426
        %v476 = vpop.permute.xlu0 %475
        %vm477 = vcmp.eq.s32.totalorder %v428, %v431
        %vm478 = vcmp.eq.s32.totalorder %v428, %v434
        %vm479 = vcmp.eq.s32.totalorder %v428, %v437
        %vm480 = vcmp.eq.s32.totalorder %v428, %v440
        %vm481 = vcmp.eq.s32.totalorder %v428, %v443
        %vm482 = vcmp.eq.s32.totalorder %v428, %v446
        %vm483 = vcmp.eq.s32.totalorder %v428, %v449
        %vm484 = vcmp.eq.s32.totalorder %v428, %v452
        %vm485 = vcmp.eq.s32.totalorder %v428, %v455
        %vm486 = vcmp.eq.s32.totalorder %v428, %v458
        %vm487 = vcmp.eq.s32.totalorder %v428, %v461
        %vm488 = vcmp.eq.s32.totalorder %v428, %v464
        %vm489 = vcmp.eq.s32.totalorder %v428, %v467
        %vm490 = vcmp.eq.s32.totalorder %v428, %v470
        %vm491 = vcmp.eq.s32.totalorder %v428, %v473
        %vm492 = vcmp.eq.s32.totalorder %v428, %v476
        %v493 = vsel %vm477, 1, 0
        %v494 = vsel %vm478, 1, 0
        %v495 = vsel %vm479, 1, 0
        %v496 = vsel %vm480, 1, 0
        %v497 = vsel %vm481, 1, 0
        %v498 = vsel %vm482, 1, 0
        %v499 = vsel %vm483, 1, 0
        %v500 = vsel %vm484, 1, 0
        %v501 = vsel %vm485, 1, 0
        %v502 = vsel %vm486, 1, 0
        %v503 = vsel %vm487, 1, 0
        %v504 = vsel %vm488, 1, 0
        %v505 = vsel %vm489, 1, 0
        %v506 = vsel %vm490, 1, 0
        %v507 = vsel %vm491, 1, 0
        %v508 = vsel %vm492, 1, 0
        %v509 = vcvt.s32.f32 %v493
        %v510 = vcvt.s32.f32 %v494
        %v511 = vcvt.s32.f32 %v495
        %v512 = vcvt.s32.f32 %v496
        %v513 = vcvt.s32.f32 %v497
        %v514 = vcvt.s32.f32 %v498
        %v515 = vcvt.s32.f32 %v499
        %v516 = vcvt.s32.f32 %v500
        %v517 = vcvt.s32.f32 %v501
        %v518 = vcvt.s32.f32 %v502
        %v519 = vcvt.s32.f32 %v503
        %v520 = vcvt.s32.f32 %v504
        %v521 = vcvt.s32.f32 %v505
        %v522 = vcvt.s32.f32 %v506
        %v523 = vcvt.s32.f32 %v507
        %v524 = vcvt.s32.f32 %v508
        %v525 = vld [vmem:[%s2] sm:$0xff]
        %v526 = vld [vmem:[%s2 + $0x8] sm:$0xff]
        %v527 = vld [vmem:[%s2 + $0x10] sm:$0xff]
        %vm528 = vcmask 64512
        %v530 = vsel %vm528, %v509, 0
        %v533 = vsel %vm528, %v510, 0
        %v536 = vsel %vm528, %v511, 0
        %v539 = vsel %vm528, %v512, 0
        %v542 = vsel %vm528, %v513, 0
        %v545 = vsel %vm528, %v514, 0
        %v548 = vsel %vm528, %v515, 0
        %v551 = vsel %vm528, %v516, 0
        %v554 = vsel %vm528, %v517, 0
        %v557 = vsel %vm528, %v518, 0
        %v560 = vsel %vm528, %v519, 0
        %v563 = vsel %vm528, %v520, 0
        %v566 = vsel %vm528, %v521, 0
        %v569 = vsel %vm528, %v522, 0
        %v572 = vsel %vm528, %v523, 0
        %v575 = vsel %vm528, %v524, 0
        %577 = vmatprep.subr.mxu0 %v526
        %578 = vmatpush1.msra.mxu0 %v525
        %579 = vmatprep.subr.mxu0 0.0
        %580 = vmatpush1.msra.mxu0 0.0
        %581 = vmatprep.subr.mxu0 0.0
        %582 = vmatpush1.msra.mxu0 0.0
        %583 = vmatprep.subr.mxu0 0.0
        %584 = vmatpush1.msra.mxu0 0.0
        %585 = vmatprep.subr.mxu0 0.0
        %586 = vmatpush1.msra.mxu0 0.0
        %587 = vmatprep.subr.mxu0 0.0
        %588 = vmatpush1.msra.mxu0 0.0
        %589 = vmatprep.subr.mxu0 0.0
        %590 = vmatpush1.msra.mxu0 0.0
        %591 = vmatprep.subr.mxu0 0.0
        %592 = vmatpush1.msra.mxu0 0.0
        %593 = vmatprep.subr.mxu0 0.0
        %594 = vmatpush1.msra.mxu0 0.0
        %595 = vmatprep.subr.mxu0 0.0
        %596 = vmatpush1.msra.mxu0 0.0
        %597 = vmatprep.subr.mxu0 0.0
        %598 = vmatpush1.msra.mxu0 0.0
        %599 = vmatprep.subr.mxu0 0.0
        %600 = vmatpush1.msra.mxu0 0.0
        %601 = vmatprep.subr.mxu0 0.0
        %602 = vmatpush1.msra.mxu0 0.0
        %603 = vmatprep.subr.mxu0 0.0
        %604 = vmatpush1.msra.mxu0 0.0
        %605 = vmatprep.subr.mxu0 0.0
        %606 = vmatpush1.msra.mxu0 0.0
        %607 = vmatprep.subr.mxu0 0.0
        %608 = vmatpush1.msra.mxu0 0.0
        %609 = vmatprep.subr.mxu0 0.0
        %610 = vmatpush1.msra.mxu0 0.0
        %611 = vmatprep.subr.mxu0 0.0
        %612 = vmatpush1.msra.mxu0 0.0
        %613 = vmatprep.subr.mxu0 0.0
        %614 = vmatpush1.msra.mxu0 0.0
        %615 = vmatprep.subr.mxu0 0.0
        %616 = vmatpush1.msra.mxu0 0.0
        %617 = vmatprep.subr.mxu0 0.0
        %618 = vmatpush1.msra.mxu0 0.0
        %619 = vmatprep.subr.mxu0 0.0
        %620 = vmatpush1.msra.mxu0 0.0
        %621 = vmatprep.subr.mxu0 0.0
        %622 = vmatpush1.msra.mxu0 0.0
        %623 = vmatprep.subr.mxu0 0.0
        %624 = vmatpush1.msra.mxu0 0.0
        %625 = vmatprep.subr.mxu0 0.0
        %626 = vmatpush1.msra.mxu0 0.0
        %627 = vmatprep.subr.mxu0 0.0
        %628 = vmatpush1.msra.mxu0 0.0
        %629 = vmatprep.subr.mxu0 0.0
        %630 = vmatpush1.msra.mxu0 0.0
        %631 = vmatprep.subr.mxu0 0.0
        %632 = vmatpush1.msra.mxu0 0.0
        %633 = vmatprep.subr.mxu0 0.0
        %634 = vmatpush1.msra.mxu0 0.0
        %635 = vmatprep.subr.mxu0 0.0
        %636 = vmatpush1.msra.mxu0 0.0
        %637 = vmatprep.subr.mxu0 0.0
        %638 = vmatpush1.msra.mxu0 0.0
        %639 = vmatprep.subr.mxu0 0.0
        %640 = vmatpush1.msra.mxu0 0.0
        %641 = vmatprep.mubr.f32.mxu0 0.0
        %642 = vmatmul.mubr.f32.gmra.mrb[0].mxu0 %v530
        %v643 = vpop.f32.mrb[0].mxu0
        %v644 = vadd.f32 0.0, %v643
        %v645 = vpop.f32.mrb[0].mxu0
        %v646 = vadd.f32 0.0, %v645
        %647 = vmatprep.mubr.f32.mxu0 0.0
        %648 = vmatmul.mubr.f32.gmra.mrb[0].mxu0 %v533
        %v649 = vpop.f32.mrb[0].mxu0
        %v650 = vadd.f32 0.0, %v649
        %v651 = vpop.f32.mrb[0].mxu0
        %v652 = vadd.f32 0.0, %v651
        %653 = vmatprep.mubr.f32.mxu0 0.0
        %654 = vmatmul.mubr.f32.gmra.mrb[0].mxu0 %v536
        %v655 = vpop.f32.mrb[0].mxu0
        %v656 = vadd.f32 0.0, %v655
        %v657 = vpop.f32.mrb[0].mxu0
        %v658 = vadd.f32 0.0, %v657
        %659 = vmatprep.mubr.f32.mxu0 0.0
        %660 = vmatmul.mubr.f32.gmra.mrb[0].mxu0 %v539
        %v661 = vpop.f32.mrb[0].mxu0
        %v662 = vadd.f32 0.0, %v661
        %v663 = vpop.f32.mrb[0].mxu0
        %v664 = vadd.f32 0.0, %v663
        %665 = vmatprep.mubr.f32.mxu0 0.0
        %666 = vmatmul.mubr.f32.gmra.mrb[0].mxu0 %v542
        %v667 = vpop.f32.mrb[0].mxu0
        %v668 = vadd.f32 0.0, %v667
        %v669 = vpop.f32.mrb[0].mxu0
        %v670 = vadd.f32 0.0, %v669
        %671 = vmatprep.mubr.f32.mxu0 0.0
        %672 = vmatmul.mubr.f32.gmra.mrb[0].mxu0 %v545
        %v673 = vpop.f32.mrb[0].mxu0
        %v674 = vadd.f32 0.0, %v673
        %v675 = vpop.f32.mrb[0].mxu0
        %v676 = vadd.f32 0.0, %v675
        %677 = vmatprep.mubr.f32.mxu0 0.0
        %678 = vmatmul.mubr.f32.gmra.mrb[0].mxu0 %v548
        %v679 = vpop.f32.mrb[0].mxu0
        %v680 = vadd.f32 0.0, %v679
        %v681 = vpop.f32.mrb[0].mxu0
        %v682 = vadd.f32 0.0, %v681
        %683 = vmatprep.mubr.f32.mxu0 0.0
        %684 = vmatmul.mubr.f32.gmra.mrb[0].mxu0 %v551
        %v685 = vpop.f32.mrb[0].mxu0
        %v686 = vadd.f32 0.0, %v685
        %v687 = vpop.f32.mrb[0].mxu0
        %v688 = vadd.f32 0.0, %v687
        %689 = vmatprep.mubr.f32.mxu0 0.0
        %690 = vmatmul.mubr.f32.gmra.mrb[0].mxu0 %v554
        %v691 = vpop.f32.mrb[0].mxu0
        %v692 = vadd.f32 0.0, %v691
        %v693 = vpop.f32.mrb[0].mxu0
        %v694 = vadd.f32 0.0, %v693
        %695 = vmatprep.mubr.f32.mxu0 0.0
        %696 = vmatmul.mubr.f32.gmra.mrb[0].mxu0 %v557
        %v697 = vpop.f32.mrb[0].mxu0
        %v698 = vadd.f32 0.0, %v697
        %v699 = vpop.f32.mrb[0].mxu0
        %v700 = vadd.f32 0.0, %v699
        %701 = vmatprep.mubr.f32.mxu0 0.0
        %702 = vmatmul.mubr.f32.gmra.mrb[0].mxu0 %v560
        %v703 = vpop.f32.mrb[0].mxu0
        %v704 = vadd.f32 0.0, %v703
        %v705 = vpop.f32.mrb[0].mxu0
        %v706 = vadd.f32 0.0, %v705
        %707 = vmatprep.mubr.f32.mxu0 0.0
        %708 = vmatmul.mubr.f32.gmra.mrb[0].mxu0 %v563
        %v709 = vpop.f32.mrb[0].mxu0
        %v710 = vadd.f32 0.0, %v709
        %v711 = vpop.f32.mrb[0].mxu0
        %v712 = vadd.f32 0.0, %v711
        %713 = vmatprep.mubr.f32.mxu0 0.0
        %714 = vmatmul.mubr.f32.gmra.mrb[0].mxu0 %v566
        %v715 = vpop.f32.mrb[0].mxu0
        %v716 = vadd.f32 0.0, %v715
        %v717 = vpop.f32.mrb[0].mxu0
        %v718 = vadd.f32 0.0, %v717
        %719 = vmatprep.mubr.f32.mxu0 0.0
        %720 = vmatmul.mubr.f32.gmra.mrb[0].mxu0 %v569
        %v721 = vpop.f32.mrb[0].mxu0
        %v722 = vadd.f32 0.0, %v721
        %v723 = vpop.f32.mrb[0].mxu0
        %v724 = vadd.f32 0.0, %v723
        %725 = vmatprep.mubr.f32.mxu0 0.0
        %726 = vmatmul.mubr.f32.gmra.mrb[0].mxu0 %v572
        %v727 = vpop.f32.mrb[0].mxu0
        %v728 = vadd.f32 0.0, %v727
        %v729 = vpop.f32.mrb[0].mxu0
        %v730 = vadd.f32 0.0, %v729
        %731 = vmatprep.mubr.f32.mxu0 0.0
        %732 = vmatmul.mubr.f32.gmra.mrb[0].mxu0 %v575
        %v733 = vpop.f32.mrb[0].mxu0
        %v734 = vadd.f32 0.0, %v733
        %v735 = vpop.f32.mrb[0].mxu0
        %v736 = vadd.f32 0.0, %v735
        %737 = vdwg.mxu0
        %738 = vmatprep.subr.mxu0 0.0
        %739 = vmatpush1.msra.mxu0 %v527
        %740 = vmatprep.subr.mxu0 0.0
        %741 = vmatpush1.msra.mxu0 0.0
        %742 = vmatprep.subr.mxu0 0.0
        %743 = vmatpush1.msra.mxu0 0.0
        %744 = vmatprep.subr.mxu0 0.0
        %745 = vmatpush1.msra.mxu0 0.0
        %746 = vmatprep.subr.mxu0 0.0
        %747 = vmatpush1.msra.mxu0 0.0
        %748 = vmatprep.subr.mxu0 0.0
        %749 = vmatpush1.msra.mxu0 0.0
        %750 = vmatprep.subr.mxu0 0.0
        %751 = vmatpush1.msra.mxu0 0.0
        %752 = vmatprep.subr.mxu0 0.0
        %753 = vmatpush1.msra.mxu0 0.0
        %754 = vmatprep.subr.mxu0 0.0
        %755 = vmatpush1.msra.mxu0 0.0
        %756 = vmatprep.subr.mxu0 0.0
        %757 = vmatpush1.msra.mxu0 0.0
        %758 = vmatprep.subr.mxu0 0.0
        %759 = vmatpush1.msra.mxu0 0.0
        %760 = vmatprep.subr.mxu0 0.0
        %761 = vmatpush1.msra.mxu0 0.0
        %762 = vmatprep.subr.mxu0 0.0
        %763 = vmatpush1.msra.mxu0 0.0
        %764 = vmatprep.subr.mxu0 0.0
        %765 = vmatpush1.msra.mxu0 0.0
        %766 = vmatprep.subr.mxu0 0.0
        %767 = vmatpush1.msra.mxu0 0.0
        %768 = vmatprep.subr.mxu0 0.0
        %769 = vmatpush1.msra.mxu0 0.0
        %770 = vmatprep.subr.mxu0 0.0
        %771 = vmatpush1.msra.mxu0 0.0
        %772 = vmatprep.subr.mxu0 0.0
        %773 = vmatpush1.msra.mxu0 0.0
        %774 = vmatprep.subr.mxu0 0.0
        %775 = vmatpush1.msra.mxu0 0.0
        %776 = vmatprep.subr.mxu0 0.0
        %777 = vmatpush1.msra.mxu0 0.0
        %778 = vmatprep.subr.mxu0 0.0
        %779 = vmatpush1.msra.mxu0 0.0
        %780 = vmatprep.subr.mxu0 0.0
        %781 = vmatpush1.msra.mxu0 0.0
        %782 = vmatprep.subr.mxu0 0.0
        %783 = vmatpush1.msra.mxu0 0.0
        %784 = vmatprep.subr.mxu0 0.0
        %785 = vmatpush1.msra.mxu0 0.0
        %786 = vmatprep.subr.mxu0 0.0
        %787 = vmatpush1.msra.mxu0 0.0
        %788 = vmatprep.subr.mxu0 0.0
        %789 = vmatpush1.msra.mxu0 0.0
        %790 = vmatprep.subr.mxu0 0.0
        %791 = vmatpush1.msra.mxu0 0.0
        %792 = vmatprep.subr.mxu0 0.0
        %793 = vmatpush1.msra.mxu0 0.0
        %794 = vmatprep.subr.mxu0 0.0
        %795 = vmatpush1.msra.mxu0 0.0
        %796 = vmatprep.subr.mxu0 0.0
        %797 = vmatpush1.msra.mxu0 0.0
        %798 = vmatprep.subr.mxu0 0.0
        %799 = vmatpush1.msra.mxu0 0.0
        %800 = vmatprep.subr.mxu0 0.0
        %801 = vmatpush1.msra.mxu0 0.0
        %802 = vmatprep.mubr.f32.mxu0 0.0
        %803 = vmatmul.mubr.f32.gmra.mrb[0].mxu0 %v530
        %v804 = vpop.f32.mrb[0].mxu0
        %v805 = vadd.f32 0.0, %v804
        %v806 = vpop.f32.mrb[0].mxu0
        %807 = vmatprep.mubr.f32.mxu0 0.0
        %808 = vmatmul.mubr.f32.gmra.mrb[0].mxu0 %v533
        %v809 = vpop.f32.mrb[0].mxu0
        %v810 = vadd.f32 0.0, %v809
        %v811 = vpop.f32.mrb[0].mxu0
        %812 = vmatprep.mubr.f32.mxu0 0.0
        %813 = vmatmul.mubr.f32.gmra.mrb[0].mxu0 %v536
        %v814 = vpop.f32.mrb[0].mxu0
        %v815 = vadd.f32 0.0, %v814
        %v816 = vpop.f32.mrb[0].mxu0
        %817 = vmatprep.mubr.f32.mxu0 0.0
        %818 = vmatmul.mubr.f32.gmra.mrb[0].mxu0 %v539
        %v819 = vpop.f32.mrb[0].mxu0
        %v820 = vadd.f32 0.0, %v819
        %v821 = vpop.f32.mrb[0].mxu0
        %822 = vmatprep.mubr.f32.mxu0 0.0
        %823 = vmatmul.mubr.f32.gmra.mrb[0].mxu0 %v542
        %v824 = vpop.f32.mrb[0].mxu0
        %v825 = vadd.f32 0.0, %v824
        %v826 = vpop.f32.mrb[0].mxu0
        %827 = vmatprep.mubr.f32.mxu0 0.0
        %828 = vmatmul.mubr.f32.gmra.mrb[0].mxu0 %v545
        %v829 = vpop.f32.mrb[0].mxu0
        %v830 = vadd.f32 0.0, %v829
        %v831 = vpop.f32.mrb[0].mxu0
        %832 = vmatprep.mubr.f32.mxu0 0.0
        %833 = vmatmul.mubr.f32.gmra.mrb[0].mxu0 %v548
        %v834 = vpop.f32.mrb[0].mxu0
        %v835 = vadd.f32 0.0, %v834
        %v836 = vpop.f32.mrb[0].mxu0
        %837 = vmatprep.mubr.f32.mxu0 0.0
        %838 = vmatmul.mubr.f32.gmra.mrb[0].mxu0 %v551
        %v839 = vpop.f32.mrb[0].mxu0
        %v840 = vadd.f32 0.0, %v839
        %v841 = vpop.f32.mrb[0].mxu0
        %842 = vmatprep.mubr.f32.mxu0 0.0
        %843 = vmatmul.mubr.f32.gmra.mrb[0].mxu0 %v554
        %v844 = vpop.f32.mrb[0].mxu0
        %v845 = vadd.f32 0.0, %v844
        %v846 = vpop.f32.mrb[0].mxu0
        %847 = vmatprep.mubr.f32.mxu0 0.0
        %848 = vmatmul.mubr.f32.gmra.mrb[0].mxu0 %v557
        %v849 = vpop.f32.mrb[0].mxu0
        %v850 = vadd.f32 0.0, %v849
        %v851 = vpop.f32.mrb[0].mxu0
        %852 = vmatprep.mubr.f32.mxu0 0.0
        %853 = vmatmul.mubr.f32.gmra.mrb[0].mxu0 %v560
        %v854 = vpop.f32.mrb[0].mxu0
        %v855 = vadd.f32 0.0, %v854
        %v856 = vpop.f32.mrb[0].mxu0
        %857 = vmatprep.mubr.f32.mxu0 0.0
        %858 = vmatmul.mubr.f32.gmra.mrb[0].mxu0 %v563
        %v859 = vpop.f32.mrb[0].mxu0
        %v860 = vadd.f32 0.0, %v859
        %v861 = vpop.f32.mrb[0].mxu0
        %862 = vmatprep.mubr.f32.mxu0 0.0
        %863 = vmatmul.mubr.f32.gmra.mrb[0].mxu0 %v566
        %v864 = vpop.f32.mrb[0].mxu0
        %v865 = vadd.f32 0.0, %v864
        %v866 = vpop.f32.mrb[0].mxu0
        %867 = vmatprep.mubr.f32.mxu0 0.0
        %868 = vmatmul.mubr.f32.gmra.mrb[0].mxu0 %v569
        %v869 = vpop.f32.mrb[0].mxu0
        %v870 = vadd.f32 0.0, %v869
        %v871 = vpop.f32.mrb[0].mxu0
        %872 = vmatprep.mubr.f32.mxu0 0.0
        %873 = vmatmul.mubr.f32.gmra.mrb[0].mxu0 %v572
        %v874 = vpop.f32.mrb[0].mxu0
        %v875 = vadd.f32 0.0, %v874
        %v876 = vpop.f32.mrb[0].mxu0
        %877 = vmatprep.mubr.f32.mxu0 0.0
        %878 = vmatmul.mubr.f32.gmra.mrb[0].mxu0 %v575
        %v879 = vpop.f32.mrb[0].mxu0
        %v880 = vadd.f32 0.0, %v879
        %v881 = vpop.f32.mrb[0].mxu0
        %882 = vdwg.mxu0
        %v883 = vld [vmem:[%s401] sm:$0xff]
        %v884 = vld [vmem:[%s401 + $0x8] sm:$0xff]
        %v885 = vld [vmem:[%s401 + $0x10] sm:$0xff]
        %v886 = vld [vmem:[%s401 + $0x18] sm:$0xff]
        %v887 = vld [vmem:[%s401 + $0x20] sm:$0xff]
        %v888 = vld [vmem:[%s401 + $0x28] sm:$0xff]
        %v889 = vld [vmem:[%s401 + $0x30] sm:$0xff]
        %v890 = vld [vmem:[%s401 + $0x38] sm:$0xff]
        %v891 = vld [vmem:[%s401 + $0x40] sm:$0xff]
        %v892 = vld [vmem:[%s401 + $0x48] sm:$0xff]
        %v893 = vld [vmem:[%s401 + $0x50] sm:$0xff]
        %v894 = vld [vmem:[%s401 + $0x58] sm:$0xff]
        %v895 = vld [vmem:[%s401 + $0x60] sm:$0xff]
        %v896 = vld [vmem:[%s401 + $0x68] sm:$0xff]
        %v897 = vld [vmem:[%s401 + $0x70] sm:$0xff]
        %v898 = vld [vmem:[%s401 + $0x78] sm:$0xff]
        %v899 = vpack.c.bf16 %v884, %v883
        %v900 = vpack.c.bf16 %v886, %v885
        %v901 = vpack.c.bf16 %v888, %v887
        %v902 = vpack.c.bf16 %v890, %v889
        %v903 = vpack.c.bf16 %v892, %v891
        %v904 = vpack.c.bf16 %v894, %v893
        %v905 = vpack.c.bf16 %v896, %v895
        %v906 = vpack.c.bf16 %v898, %v897
        %v907 = vld [vmem:[%s3] sm:$0xf]
        %v908 = vld [vmem:[%s3 + $0x4] sm:$0xf]
        %v909 = vld [vmem:[%s3 + $0x8] sm:$0xf]
        %v910 = vld [vmem:[%s3 + $0xc] sm:$0xf]
        %v911 = vld [vmem:[%s4] sm:$0x1]
        %v913 = vlaneseq
        %v914 = vshrl.u32 %v913, 7
        %v915 = vsub.s32 0, %v914
        %v916 = vrot.slane %v911, %v915
        %v922 = vunpack.c.l.b16 %v907
        %v923 = vunpack.c.l.b16 %v908
        %v924 = vunpack.c.l.b16 %v909
        %v925 = vunpack.c.l.b16 %v910
        %v926 = vpack.c.b16 %v923, %v922
        %v927 = vpack.c.b16 %v925, %v924
        %vm930 = vcmask 261120
        %v932 = vsel %vm930, %v899, 0
        %v935 = vsel %vm930, %v900, 0
        %v938 = vsel %vm930, %v901, 0
        %v941 = vsel %vm930, %v902, 0
        %v944 = vsel %vm930, %v903, 0
        %v947 = vsel %vm930, %v904, 0
        %v950 = vsel %vm930, %v905, 0
        %v953 = vsel %vm930, %v906, 0
        %955 = vmatprep.subr.bf16.mxu0 0
        %956 = vmatpush1.bf16.msra.mxu0 %v926
        %957 = vmatprep.subr.bf16.mxu0 0
        %958 = vmatpush1.bf16.msra.mxu0 %v927
        %959 = vmatprep.subr.bf16.mxu0 0
        %960 = vmatpush1.bf16.msra.mxu0 0
        %961 = vmatprep.subr.bf16.mxu0 0
        %962 = vmatpush1.bf16.msra.mxu0 0
        %963 = vmatprep.subr.bf16.mxu0 0
        %964 = vmatpush1.bf16.msra.mxu0 0
        %965 = vmatprep.subr.bf16.mxu0 0
        %966 = vmatpush1.bf16.msra.mxu0 0
        %967 = vmatprep.subr.bf16.mxu0 0
        %968 = vmatpush1.bf16.msra.mxu0 0
        %969 = vmatprep.subr.bf16.mxu0 0
        %970 = vmatpush1.bf16.msra.mxu0 0
        %971 = vmatprep.subr.bf16.mxu0 0
        %972 = vmatpush1.bf16.msra.mxu0 0
        %973 = vmatprep.subr.bf16.mxu0 0
        %974 = vmatpush1.bf16.msra.mxu0 0
        %975 = vmatprep.subr.bf16.mxu0 0
        %976 = vmatpush1.bf16.msra.mxu0 0
        %977 = vmatprep.subr.bf16.mxu0 0
        %978 = vmatpush1.bf16.msra.mxu0 0
        %979 = vmatprep.subr.bf16.mxu0 0
        %980 = vmatpush1.bf16.msra.mxu0 0
        %981 = vmatprep.subr.bf16.mxu0 0
        %982 = vmatpush1.bf16.msra.mxu0 0
        %983 = vmatprep.subr.bf16.mxu0 0
        %984 = vmatpush1.bf16.msra.mxu0 0
        %985 = vmatprep.subr.bf16.mxu0 0
        %986 = vmatpush1.bf16.msra.mxu0 0
        %987 = vmatprep.mubr.bf16.mxu0 0
        %988 = vmatmul.mubr.bf16.gmra.mrb[0].mxu0 %v932
        %v989 = vpop.f32.mrb[0].mxu0
        %v990 = vadd.f32 %v916, %v989
        %v991 = vpop.f32.mrb[0].mxu0
        %v992 = vpop.f32.mrb[0].mxu0
        %v993 = vadd.f32 %v916, %v992
        %v994 = vpop.f32.mrb[0].mxu0
        %995 = vmatprep.mubr.bf16.mxu0 0
        %996 = vmatmul.mubr.bf16.gmra.mrb[0].mxu0 %v935
        %v997 = vpop.f32.mrb[0].mxu0
        %v998 = vadd.f32 %v916, %v997
        %v999 = vpop.f32.mrb[0].mxu0
        %v1000 = vpop.f32.mrb[0].mxu0
        %v1001 = vadd.f32 %v916, %v1000
        %v1002 = vpop.f32.mrb[0].mxu0
        %1003 = vmatprep.mubr.bf16.mxu0 0
        %1004 = vmatmul.mubr.bf16.gmra.mrb[0].mxu0 %v938
        %v1005 = vpop.f32.mrb[0].mxu0
        %v1006 = vadd.f32 %v916, %v1005
        %v1007 = vpop.f32.mrb[0].mxu0
        %v1008 = vpop.f32.mrb[0].mxu0
        %v1009 = vadd.f32 %v916, %v1008
        %v1010 = vpop.f32.mrb[0].mxu0
        %1011 = vmatprep.mubr.bf16.mxu0 0
        %1012 = vmatmul.mubr.bf16.gmra.mrb[0].mxu0 %v941
        %v1013 = vpop.f32.mrb[0].mxu0
        %v1014 = vadd.f32 %v916, %v1013
        %v1015 = vpop.f32.mrb[0].mxu0
        %v1016 = vpop.f32.mrb[0].mxu0
        %v1017 = vadd.f32 %v916, %v1016
        %v1018 = vpop.f32.mrb[0].mxu0
        %1019 = vmatprep.mubr.bf16.mxu0 0
        %1020 = vmatmul.mubr.bf16.gmra.mrb[0].mxu0 %v944
        %v1021 = vpop.f32.mrb[0].mxu0
        %v1022 = vadd.f32 %v916, %v1021
        %v1023 = vpop.f32.mrb[0].mxu0
        %v1024 = vpop.f32.mrb[0].mxu0
        %v1025 = vadd.f32 %v916, %v1024
        %v1026 = vpop.f32.mrb[0].mxu0
        %1027 = vmatprep.mubr.bf16.mxu0 0
        %1028 = vmatmul.mubr.bf16.gmra.mrb[0].mxu0 %v947
        %v1029 = vpop.f32.mrb[0].mxu0
        %v1030 = vadd.f32 %v916, %v1029
        %v1031 = vpop.f32.mrb[0].mxu0
        %v1032 = vpop.f32.mrb[0].mxu0
        %v1033 = vadd.f32 %v916, %v1032
        %v1034 = vpop.f32.mrb[0].mxu0
        %1035 = vmatprep.mubr.bf16.mxu0 0
        %1036 = vmatmul.mubr.bf16.gmra.mrb[0].mxu0 %v950
        %v1037 = vpop.f32.mrb[0].mxu0
        %v1038 = vadd.f32 %v916, %v1037
        %v1039 = vpop.f32.mrb[0].mxu0
        %v1040 = vpop.f32.mrb[0].mxu0
        %v1041 = vadd.f32 %v916, %v1040
        %v1042 = vpop.f32.mrb[0].mxu0
        %1043 = vmatprep.mubr.bf16.mxu0 0
        %1044 = vmatmul.mubr.bf16.gmra.mrb[0].mxu0 %v953
        %v1045 = vpop.f32.mrb[0].mxu0
        %v1046 = vadd.f32 %v916, %v1045
        %v1047 = vpop.f32.mrb[0].mxu0
        %v1048 = vpop.f32.mrb[0].mxu0
        %v1049 = vadd.f32 %v916, %v1048
        %v1050 = vpop.f32.mrb[0].mxu0
        %1051 = vdwg.mxu0
        %v1052 = vmul.f32 %v644, %v990
        %v1053 = vmul.f32 %v650, %v993
        %v1054 = vmul.f32 %v656, %v998
        %v1055 = vmul.f32 %v662, %v1001
        %v1056 = vmul.f32 %v668, %v1006
        %v1057 = vmul.f32 %v674, %v1009
        %v1058 = vmul.f32 %v680, %v1014
        %v1059 = vmul.f32 %v686, %v1017
        %v1060 = vmul.f32 %v692, %v1022
        %v1061 = vmul.f32 %v698, %v1025
        %v1062 = vmul.f32 %v704, %v1030
        %v1063 = vmul.f32 %v710, %v1033
        %v1064 = vmul.f32 %v716, %v1038
        %v1065 = vmul.f32 %v722, %v1041
        %v1066 = vmul.f32 %v728, %v1046
        %v1067 = vmul.f32 %v734, %v1049
        %v1068 = vmax.f32 %v1052, 0.0
        %v1069 = vmax.f32 %v1053, 0.0
        %v1070 = vmax.f32 %v1054, 0.0
        %v1071 = vmax.f32 %v1055, 0.0
        %v1072 = vmax.f32 %v1056, 0.0
        %v1073 = vmax.f32 %v1057, 0.0
        %v1074 = vmax.f32 %v1058, 0.0
        %v1075 = vmax.f32 %v1059, 0.0
        %v1076 = vmax.f32 %v1060, 0.0
        %v1077 = vmax.f32 %v1061, 0.0
        %v1078 = vmax.f32 %v1062, 0.0
        %v1079 = vmax.f32 %v1063, 0.0
        %v1080 = vmax.f32 %v1064, 0.0
        %v1081 = vmax.f32 %v1065, 0.0
        %v1082 = vmax.f32 %v1066, 0.0
        %v1083 = vmax.f32 %v1067, 0.0
        %v1084 = vand.u32 2147483647, %v1052
        %v1085 = vand.u32 2147483647, %v1053
        %v1086 = vand.u32 2147483647, %v1054
        %v1087 = vand.u32 2147483647, %v1055
        %v1088 = vand.u32 2147483647, %v1056
        %v1089 = vand.u32 2147483647, %v1057
        %v1090 = vand.u32 2147483647, %v1058
        %v1091 = vand.u32 2147483647, %v1059
        %v1092 = vand.u32 2147483647, %v1060
        %v1093 = vand.u32 2147483647, %v1061
        %v1094 = vand.u32 2147483647, %v1062
        %v1095 = vand.u32 2147483647, %v1063
        %v1096 = vand.u32 2147483647, %v1064
        %v1097 = vand.u32 2147483647, %v1065
        %v1098 = vand.u32 2147483647, %v1066
        %v1099 = vand.u32 2147483647, %v1067
        %v1100 = vsub.f32 0.0, %v1084
        %v1101 = vsub.f32 0.0, %v1085
        %v1102 = vsub.f32 0.0, %v1086
        %v1103 = vsub.f32 0.0, %v1087
        %v1104 = vsub.f32 0.0, %v1088
        %v1105 = vsub.f32 0.0, %v1089
        %v1106 = vsub.f32 0.0, %v1090
        %v1107 = vsub.f32 0.0, %v1091
        %v1108 = vsub.f32 0.0, %v1092
        %v1109 = vsub.f32 0.0, %v1093
        %v1110 = vsub.f32 0.0, %v1094
        %v1111 = vsub.f32 0.0, %v1095
        %v1112 = vsub.f32 0.0, %v1096
        %v1113 = vsub.f32 0.0, %v1097
        %v1114 = vsub.f32 0.0, %v1098
        %v1115 = vsub.f32 0.0, %v1099
        %v1116 = vmul.f32 %v1100, 1.442695
        %v1117 = vpow.pop %v1116
        %v1118 = vmul.f32 %v1101, 1.442695
        %v1119 = vpow.pop %v1118
        %v1120 = vmul.f32 %v1102, 1.442695
        %v1121 = vpow.pop %v1120
        %v1122 = vmul.f32 %v1103, 1.442695
        %v1123 = vpow.pop %v1122
        %v1124 = vmul.f32 %v1104, 1.442695
        %v1125 = vpow.pop %v1124
        %v1126 = vmul.f32 %v1105, 1.442695
        %v1127 = vpow.pop %v1126
        %v1128 = vmul.f32 %v1106, 1.442695
        %v1129 = vpow.pop %v1128
        %v1130 = vmul.f32 %v1107, 1.442695
        %v1131 = vpow.pop %v1130
        %v1132 = vmul.f32 %v1108, 1.442695
        %v1133 = vpow.pop %v1132
        %v1134 = vmul.f32 %v1109, 1.442695
        %v1135 = vpow.pop %v1134
        %v1136 = vmul.f32 %v1110, 1.442695
        %v1137 = vpow.pop %v1136
        %v1138 = vmul.f32 %v1111, 1.442695
        %v1139 = vpow.pop %v1138
        %v1140 = vmul.f32 %v1112, 1.442695
        %v1141 = vpow.pop %v1140
        %v1142 = vmul.f32 %v1113, 1.442695
        %v1143 = vpow.pop %v1142
        %v1144 = vmul.f32 %v1114, 1.442695
        %v1145 = vpow.pop %v1144
        %v1146 = vmul.f32 %v1115, 1.442695
        %v1147 = vpow.pop %v1146
        %v1148 = vadd.f32 %v1117, 1.0
        %v1149 = vadd.f32 %v1119, 1.0
        %v1150 = vadd.f32 %v1121, 1.0
        %v1151 = vadd.f32 %v1123, 1.0
        %v1152 = vadd.f32 %v1125, 1.0
        %v1153 = vadd.f32 %v1127, 1.0
        %v1154 = vadd.f32 %v1129, 1.0
        %v1155 = vadd.f32 %v1131, 1.0
        %v1156 = vadd.f32 %v1133, 1.0
        %v1157 = vadd.f32 %v1135, 1.0
        %v1158 = vadd.f32 %v1137, 1.0
        %v1159 = vadd.f32 %v1139, 1.0
        %v1160 = vadd.f32 %v1141, 1.0
        %v1161 = vadd.f32 %v1143, 1.0
        %v1162 = vadd.f32 %v1145, 1.0
        %v1163 = vadd.f32 %v1147, 1.0
        %v1164 = vlog2.pop %v1148
        %v1165 = vmul.f32 %v1164, 0.6931472
        %v1166 = vlog2.pop %v1149
        %v1167 = vmul.f32 %v1166, 0.6931472
        %v1168 = vlog2.pop %v1150
        %v1169 = vmul.f32 %v1168, 0.6931472
        %v1170 = vlog2.pop %v1151
        %v1171 = vmul.f32 %v1170, 0.6931472
        %v1172 = vlog2.pop %v1152
        %v1173 = vmul.f32 %v1172, 0.6931472
        %v1174 = vlog2.pop %v1153
        %v1175 = vmul.f32 %v1174, 0.6931472
        %v1176 = vlog2.pop %v1154
        %v1177 = vmul.f32 %v1176, 0.6931472
        %v1178 = vlog2.pop %v1155
        %v1179 = vmul.f32 %v1178, 0.6931472
        %v1180 = vlog2.pop %v1156
        %v1181 = vmul.f32 %v1180, 0.6931472
        %v1182 = vlog2.pop %v1157
        %v1183 = vmul.f32 %v1182, 0.6931472
        %v1184 = vlog2.pop %v1158
        %v1185 = vmul.f32 %v1184, 0.6931472
        %v1186 = vlog2.pop %v1159
        %v1187 = vmul.f32 %v1186, 0.6931472
        %v1188 = vlog2.pop %v1160
        %v1189 = vmul.f32 %v1188, 0.6931472
        %v1190 = vlog2.pop %v1161
        %v1191 = vmul.f32 %v1190, 0.6931472
        %v1192 = vlog2.pop %v1162
        %v1193 = vmul.f32 %v1192, 0.6931472
        %v1194 = vlog2.pop %v1163
        %v1195 = vmul.f32 %v1194, 0.6931472
        %v1196 = vadd.f32 %v1068, %v1165
        %v1197 = vadd.f32 %v1069, %v1167
        %v1198 = vadd.f32 %v1070, %v1169
        %v1199 = vadd.f32 %v1071, %v1171
        %v1200 = vadd.f32 %v1072, %v1173
        %v1201 = vadd.f32 %v1073, %v1175
        %v1202 = vadd.f32 %v1074, %v1177
        %v1203 = vadd.f32 %v1075, %v1179
        %v1204 = vadd.f32 %v1076, %v1181
        %v1205 = vadd.f32 %v1077, %v1183
        %v1206 = vadd.f32 %v1078, %v1185
        %v1207 = vadd.f32 %v1079, %v1187
        %v1208 = vadd.f32 %v1080, %v1189
        %v1209 = vadd.f32 %v1081, %v1191
        %v1210 = vadd.f32 %v1082, %v1193
        %v1211 = vadd.f32 %v1083, %v1195
        %v1212 = vpack.c.bf16 %v1197, %v1196
        %v1213 = vpack.c.bf16 %v1199, %v1198
        %v1214 = vpack.c.bf16 %v1201, %v1200
        %v1215 = vpack.c.bf16 %v1203, %v1202
        %v1216 = vpack.c.bf16 %v1205, %v1204
        %v1217 = vpack.c.bf16 %v1207, %v1206
        %v1218 = vpack.c.bf16 %v1209, %v1208
        %v1219 = vpack.c.bf16 %v1211, %v1210
        %v1220 = vld [vmem:[%s5] sm:$0xf]
        %v1221 = vld [vmem:[%s5 + $0x4] sm:$0xf]
        %v1222 = vld [vmem:[%s5 + $0x8] sm:$0xf]
        %v1223 = vld [vmem:[%s5 + $0xc] sm:$0xf]
        %v1224 = vld [vmem:[%s5 + $0x10] sm:$0xf]
        %v1225 = vld [vmem:[%s5 + $0x14] sm:$0xf]
        %v1226 = vld [vmem:[%s5 + $0x18] sm:$0xf]
        %v1227 = vld [vmem:[%s5 + $0x1c] sm:$0xf]
        %v1228 = vld [vmem:[%s5 + $0x20] sm:$0xf]
        %v1229 = vld [vmem:[%s5 + $0x24] sm:$0xf]
        %v1230 = vld [vmem:[%s5 + $0x28] sm:$0xf]
        %v1231 = vld [vmem:[%s5 + $0x2c] sm:$0xf]
        %v1232 = vld [vmem:[%s5 + $0x30] sm:$0xf]
        %v1233 = vld [vmem:[%s5 + $0x34] sm:$0xf]
        %v1234 = vld [vmem:[%s5 + $0x38] sm:$0xf]
        %v1235 = vld [vmem:[%s5 + $0x3c] sm:$0xf]
        %v1236 = vld [vmem:[%s6] sm:$0x1]
        %v1238 = vlaneseq
        %v1239 = vshrl.u32 %v1238, 7
        %v1240 = vsub.s32 0, %v1239
        %v1241 = vrot.slane %v1236, %v1240
        %v1259 = vunpack.c.l.b16 %v1220
        %v1260 = vunpack.c.l.b16 %v1221
        %v1261 = vunpack.c.l.b16 %v1222
        %v1262 = vunpack.c.l.b16 %v1223
        %v1263 = vunpack.c.l.b16 %v1224
        %v1264 = vunpack.c.l.b16 %v1225
        %v1265 = vunpack.c.l.b16 %v1226
        %v1266 = vunpack.c.l.b16 %v1227
        %v1267 = vunpack.c.l.b16 %v1228
        %v1268 = vunpack.c.l.b16 %v1229
        %v1269 = vunpack.c.l.b16 %v1230
        %v1270 = vunpack.c.l.b16 %v1231
        %v1271 = vunpack.c.l.b16 %v1232
        %v1272 = vunpack.c.l.b16 %v1233
        %v1273 = vunpack.c.l.b16 %v1234
        %v1274 = vunpack.c.l.b16 %v1235
        %v1275 = vpack.c.b16 %v1260, %v1259
        %v1276 = vpack.c.b16 %v1262, %v1261
        %v1277 = vpack.c.b16 %v1264, %v1263
        %v1278 = vpack.c.b16 %v1266, %v1265
        %v1279 = vpack.c.b16 %v1268, %v1267
        %v1280 = vpack.c.b16 %v1270, %v1269
        %v1281 = vpack.c.b16 %v1272, %v1271
        %v1282 = vpack.c.b16 %v1274, %v1273
        %1291 = vmatprep.subr.bf16.mxu0 0
        %1292 = vmatpush1.bf16.msra.mxu0 %v1275
        %1293 = vmatprep.subr.bf16.mxu0 0
        %1294 = vmatpush1.bf16.msra.mxu0 %v1276
        %1295 = vmatprep.subr.bf16.mxu0 0
        %1296 = vmatpush1.bf16.msra.mxu0 %v1277
        %1297 = vmatprep.subr.bf16.mxu0 0
        %1298 = vmatpush1.bf16.msra.mxu0 %v1278
        %1299 = vmatprep.subr.bf16.mxu0 0
        %1300 = vmatpush1.bf16.msra.mxu0 %v1279
        %1301 = vmatprep.subr.bf16.mxu0 0
        %1302 = vmatpush1.bf16.msra.mxu0 %v1280
        %1303 = vmatprep.subr.bf16.mxu0 0
        %1304 = vmatpush1.bf16.msra.mxu0 %v1281
        %1305 = vmatprep.subr.bf16.mxu0 0
        %1306 = vmatpush1.bf16.msra.mxu0 %v1282
        %1307 = vmatprep.subr.bf16.mxu0 0
        %1308 = vmatpush1.bf16.msra.mxu0 0
        %1309 = vmatprep.subr.bf16.mxu0 0
        %1310 = vmatpush1.bf16.msra.mxu0 0
        %1311 = vmatprep.subr.bf16.mxu0 0
        %1312 = vmatpush1.bf16.msra.mxu0 0
        %1313 = vmatprep.subr.bf16.mxu0 0
        %1314 = vmatpush1.bf16.msra.mxu0 0
        %1315 = vmatprep.subr.bf16.mxu0 0
        %1316 = vmatpush1.bf16.msra.mxu0 0
        %1317 = vmatprep.subr.bf16.mxu0 0
        %1318 = vmatpush1.bf16.msra.mxu0 0
        %1319 = vmatprep.subr.bf16.mxu0 0
        %1320 = vmatpush1.bf16.msra.mxu0 0
        %1321 = vmatprep.subr.bf16.mxu0 0
        %1322 = vmatpush1.bf16.msra.mxu0 0
        %1323 = vmatprep.mubr.bf16.mxu0 0
        %1324 = vmatmul.mubr.bf16.gmra.mrb[0].mxu0 %v1212
        %v1325 = vpop.f32.mrb[0].mxu0
        %v1326 = vadd.f32 %v1241, %v1325
        %v1327 = vpop.f32.mrb[0].mxu0
        %v1328 = vpop.f32.mrb[0].mxu0
        %v1329 = vadd.f32 %v1241, %v1328
        %v1330 = vpop.f32.mrb[0].mxu0
        %1331 = vmatprep.mubr.bf16.mxu0 0
        %1332 = vmatmul.mubr.bf16.gmra.mrb[0].mxu0 %v1213
        %v1333 = vpop.f32.mrb[0].mxu0
        %v1334 = vadd.f32 %v1241, %v1333
        %v1335 = vpop.f32.mrb[0].mxu0
        %v1336 = vpop.f32.mrb[0].mxu0
        %v1337 = vadd.f32 %v1241, %v1336
        %v1338 = vpop.f32.mrb[0].mxu0
        %1339 = vmatprep.mubr.bf16.mxu0 0
        %1340 = vmatmul.mubr.bf16.gmra.mrb[0].mxu0 %v1214
        %v1341 = vpop.f32.mrb[0].mxu0
        %v1342 = vadd.f32 %v1241, %v1341
        %v1343 = vpop.f32.mrb[0].mxu0
        %v1344 = vpop.f32.mrb[0].mxu0
        %v1345 = vadd.f32 %v1241, %v1344
        %v1346 = vpop.f32.mrb[0].mxu0
        %1347 = vmatprep.mubr.bf16.mxu0 0
        %1348 = vmatmul.mubr.bf16.gmra.mrb[0].mxu0 %v1215
        %v1349 = vpop.f32.mrb[0].mxu0
        %v1350 = vadd.f32 %v1241, %v1349
        %v1351 = vpop.f32.mrb[0].mxu0
        %v1352 = vpop.f32.mrb[0].mxu0
        %v1353 = vadd.f32 %v1241, %v1352
        %v1354 = vpop.f32.mrb[0].mxu0
        %1355 = vmatprep.mubr.bf16.mxu0 0
        %1356 = vmatmul.mubr.bf16.gmra.mrb[0].mxu0 %v1216
        %v1357 = vpop.f32.mrb[0].mxu0
        %v1358 = vadd.f32 %v1241, %v1357
        %v1359 = vpop.f32.mrb[0].mxu0
        %v1360 = vpop.f32.mrb[0].mxu0
        %v1361 = vadd.f32 %v1241, %v1360
        %v1362 = vpop.f32.mrb[0].mxu0
        %1363 = vmatprep.mubr.bf16.mxu0 0
        %1364 = vmatmul.mubr.bf16.gmra.mrb[0].mxu0 %v1217
        %v1365 = vpop.f32.mrb[0].mxu0
        %v1366 = vadd.f32 %v1241, %v1365
        %v1367 = vpop.f32.mrb[0].mxu0
        %v1368 = vpop.f32.mrb[0].mxu0
        %v1369 = vadd.f32 %v1241, %v1368
        %v1370 = vpop.f32.mrb[0].mxu0
        %1371 = vmatprep.mubr.bf16.mxu0 0
        %1372 = vmatmul.mubr.bf16.gmra.mrb[0].mxu0 %v1218
        %v1373 = vpop.f32.mrb[0].mxu0
        %v1374 = vadd.f32 %v1241, %v1373
        %v1375 = vpop.f32.mrb[0].mxu0
        %v1376 = vpop.f32.mrb[0].mxu0
        %v1377 = vadd.f32 %v1241, %v1376
        %v1378 = vpop.f32.mrb[0].mxu0
        %1379 = vmatprep.mubr.bf16.mxu0 0
        %1380 = vmatmul.mubr.bf16.gmra.mrb[0].mxu0 %v1219
        %v1381 = vpop.f32.mrb[0].mxu0
        %v1382 = vadd.f32 %v1241, %v1381
        %v1383 = vpop.f32.mrb[0].mxu0
        %v1384 = vpop.f32.mrb[0].mxu0
        %v1385 = vadd.f32 %v1241, %v1384
        %v1386 = vpop.f32.mrb[0].mxu0
        %1387 = vdwg.mxu0
        %v1388 = vmul.f32 %v646, %v1326
        %v1389 = vmul.f32 %v652, %v1329
        %v1390 = vmul.f32 %v658, %v1334
        %v1391 = vmul.f32 %v664, %v1337
        %v1392 = vmul.f32 %v670, %v1342
        %v1393 = vmul.f32 %v676, %v1345
        %v1394 = vmul.f32 %v682, %v1350
        %v1395 = vmul.f32 %v688, %v1353
        %v1396 = vmul.f32 %v694, %v1358
        %v1397 = vmul.f32 %v700, %v1361
        %v1398 = vmul.f32 %v706, %v1366
        %v1399 = vmul.f32 %v712, %v1369
        %v1400 = vmul.f32 %v718, %v1374
        %v1401 = vmul.f32 %v724, %v1377
        %v1402 = vmul.f32 %v730, %v1382
        %v1403 = vmul.f32 %v736, %v1385
        %v1404 = vmax.f32 %v1388, 0.0
        %v1405 = vmax.f32 %v1389, 0.0
        %v1406 = vmax.f32 %v1390, 0.0
        %v1407 = vmax.f32 %v1391, 0.0
        %v1408 = vmax.f32 %v1392, 0.0
        %v1409 = vmax.f32 %v1393, 0.0
        %v1410 = vmax.f32 %v1394, 0.0
        %v1411 = vmax.f32 %v1395, 0.0
        %v1412 = vmax.f32 %v1396, 0.0
        %v1413 = vmax.f32 %v1397, 0.0
        %v1414 = vmax.f32 %v1398, 0.0
        %v1415 = vmax.f32 %v1399, 0.0
        %v1416 = vmax.f32 %v1400, 0.0
        %v1417 = vmax.f32 %v1401, 0.0
        %v1418 = vmax.f32 %v1402, 0.0
        %v1419 = vmax.f32 %v1403, 0.0
        %v1420 = vand.u32 2147483647, %v1388
        %v1421 = vand.u32 2147483647, %v1389
        %v1422 = vand.u32 2147483647, %v1390
        %v1423 = vand.u32 2147483647, %v1391
        %v1424 = vand.u32 2147483647, %v1392
        %v1425 = vand.u32 2147483647, %v1393
        %v1426 = vand.u32 2147483647, %v1394
        %v1427 = vand.u32 2147483647, %v1395
        %v1428 = vand.u32 2147483647, %v1396
        %v1429 = vand.u32 2147483647, %v1397
        %v1430 = vand.u32 2147483647, %v1398
        %v1431 = vand.u32 2147483647, %v1399
        %v1432 = vand.u32 2147483647, %v1400
        %v1433 = vand.u32 2147483647, %v1401
        %v1434 = vand.u32 2147483647, %v1402
        %v1435 = vand.u32 2147483647, %v1403
        %v1436 = vsub.f32 0.0, %v1420
        %v1437 = vsub.f32 0.0, %v1421
        %v1438 = vsub.f32 0.0, %v1422
        %v1439 = vsub.f32 0.0, %v1423
        %v1440 = vsub.f32 0.0, %v1424
        %v1441 = vsub.f32 0.0, %v1425
        %v1442 = vsub.f32 0.0, %v1426
        %v1443 = vsub.f32 0.0, %v1427
        %v1444 = vsub.f32 0.0, %v1428
        %v1445 = vsub.f32 0.0, %v1429
        %v1446 = vsub.f32 0.0, %v1430
        %v1447 = vsub.f32 0.0, %v1431
        %v1448 = vsub.f32 0.0, %v1432
        %v1449 = vsub.f32 0.0, %v1433
        %v1450 = vsub.f32 0.0, %v1434
        %v1451 = vsub.f32 0.0, %v1435
        %v1452 = vmul.f32 %v1436, 1.442695
        %v1453 = vpow.pop %v1452
        %v1454 = vmul.f32 %v1437, 1.442695
        %v1455 = vpow.pop %v1454
        %v1456 = vmul.f32 %v1438, 1.442695
        %v1457 = vpow.pop %v1456
        %v1458 = vmul.f32 %v1439, 1.442695
        %v1459 = vpow.pop %v1458
        %v1460 = vmul.f32 %v1440, 1.442695
        %v1461 = vpow.pop %v1460
        %v1462 = vmul.f32 %v1441, 1.442695
        %v1463 = vpow.pop %v1462
        %v1464 = vmul.f32 %v1442, 1.442695
        %v1465 = vpow.pop %v1464
        %v1466 = vmul.f32 %v1443, 1.442695
        %v1467 = vpow.pop %v1466
        %v1468 = vmul.f32 %v1444, 1.442695
        %v1469 = vpow.pop %v1468
        %v1470 = vmul.f32 %v1445, 1.442695
        %v1471 = vpow.pop %v1470
        %v1472 = vmul.f32 %v1446, 1.442695
        %v1473 = vpow.pop %v1472
        %v1474 = vmul.f32 %v1447, 1.442695
        %v1475 = vpow.pop %v1474
        %v1476 = vmul.f32 %v1448, 1.442695
        %v1477 = vpow.pop %v1476
        %v1478 = vmul.f32 %v1449, 1.442695
        %v1479 = vpow.pop %v1478
        %v1480 = vmul.f32 %v1450, 1.442695
        %v1481 = vpow.pop %v1480
        %v1482 = vmul.f32 %v1451, 1.442695
        %v1483 = vpow.pop %v1482
        %v1484 = vadd.f32 %v1453, 1.0
        %v1485 = vadd.f32 %v1455, 1.0
        %v1486 = vadd.f32 %v1457, 1.0
        %v1487 = vadd.f32 %v1459, 1.0
        %v1488 = vadd.f32 %v1461, 1.0
        %v1489 = vadd.f32 %v1463, 1.0
        %v1490 = vadd.f32 %v1465, 1.0
        %v1491 = vadd.f32 %v1467, 1.0
        %v1492 = vadd.f32 %v1469, 1.0
        %v1493 = vadd.f32 %v1471, 1.0
        %v1494 = vadd.f32 %v1473, 1.0
        %v1495 = vadd.f32 %v1475, 1.0
        %v1496 = vadd.f32 %v1477, 1.0
        %v1497 = vadd.f32 %v1479, 1.0
        %v1498 = vadd.f32 %v1481, 1.0
        %v1499 = vadd.f32 %v1483, 1.0
        %v1500 = vlog2.pop %v1484
        %v1501 = vmul.f32 %v1500, 0.6931472
        %v1502 = vlog2.pop %v1485
        %v1503 = vmul.f32 %v1502, 0.6931472
        %v1504 = vlog2.pop %v1486
        %v1505 = vmul.f32 %v1504, 0.6931472
        %v1506 = vlog2.pop %v1487
        %v1507 = vmul.f32 %v1506, 0.6931472
        %v1508 = vlog2.pop %v1488
        %v1509 = vmul.f32 %v1508, 0.6931472
        %v1510 = vlog2.pop %v1489
        %v1511 = vmul.f32 %v1510, 0.6931472
        %v1512 = vlog2.pop %v1490
        %v1513 = vmul.f32 %v1512, 0.6931472
        %v1514 = vlog2.pop %v1491
        %v1515 = vmul.f32 %v1514, 0.6931472
        %v1516 = vlog2.pop %v1492
        %v1517 = vmul.f32 %v1516, 0.6931472
        %v1518 = vlog2.pop %v1493
        %v1519 = vmul.f32 %v1518, 0.6931472
        %v1520 = vlog2.pop %v1494
        %v1521 = vmul.f32 %v1520, 0.6931472
        %v1522 = vlog2.pop %v1495
        %v1523 = vmul.f32 %v1522, 0.6931472
        %v1524 = vlog2.pop %v1496
        %v1525 = vmul.f32 %v1524, 0.6931472
        %v1526 = vlog2.pop %v1497
        %v1527 = vmul.f32 %v1526, 0.6931472
        %v1528 = vlog2.pop %v1498
        %v1529 = vmul.f32 %v1528, 0.6931472
        %v1530 = vlog2.pop %v1499
        %v1531 = vmul.f32 %v1530, 0.6931472
        %v1532 = vadd.f32 %v1404, %v1501
        %v1533 = vadd.f32 %v1405, %v1503
        %v1534 = vadd.f32 %v1406, %v1505
        %v1535 = vadd.f32 %v1407, %v1507
        %v1536 = vadd.f32 %v1408, %v1509
        %v1537 = vadd.f32 %v1409, %v1511
        %v1538 = vadd.f32 %v1410, %v1513
        %v1539 = vadd.f32 %v1411, %v1515
        %v1540 = vadd.f32 %v1412, %v1517
        %v1541 = vadd.f32 %v1413, %v1519
        %v1542 = vadd.f32 %v1414, %v1521
        %v1543 = vadd.f32 %v1415, %v1523
        %v1544 = vadd.f32 %v1416, %v1525
        %v1545 = vadd.f32 %v1417, %v1527
        %v1546 = vadd.f32 %v1418, %v1529
        %v1547 = vadd.f32 %v1419, %v1531
        %v1548 = vpack.c.bf16 %v1533, %v1532
        %v1549 = vpack.c.bf16 %v1535, %v1534
        %v1550 = vpack.c.bf16 %v1537, %v1536
        %v1551 = vpack.c.bf16 %v1539, %v1538
        %v1552 = vpack.c.bf16 %v1541, %v1540
        %v1553 = vpack.c.bf16 %v1543, %v1542
        %v1554 = vpack.c.bf16 %v1545, %v1544
        %v1555 = vpack.c.bf16 %v1547, %v1546
        %v1556 = vld [vmem:[%s7] sm:$0xf]
        %v1557 = vld [vmem:[%s7 + $0x4] sm:$0xf]
        %v1558 = vld [vmem:[%s7 + $0x8] sm:$0xf]
        %v1559 = vld [vmem:[%s7 + $0xc] sm:$0xf]
        %v1560 = vld [vmem:[%s7 + $0x10] sm:$0xf]
        %v1561 = vld [vmem:[%s7 + $0x14] sm:$0xf]
        %v1562 = vld [vmem:[%s7 + $0x18] sm:$0xf]
        %v1563 = vld [vmem:[%s7 + $0x1c] sm:$0xf]
        %v1564 = vld [vmem:[%s7 + $0x20] sm:$0xf]
        %v1565 = vld [vmem:[%s7 + $0x24] sm:$0xf]
        %v1566 = vld [vmem:[%s7 + $0x28] sm:$0xf]
        %v1567 = vld [vmem:[%s7 + $0x2c] sm:$0xf]
        %v1568 = vld [vmem:[%s7 + $0x30] sm:$0xf]
        %v1569 = vld [vmem:[%s7 + $0x34] sm:$0xf]
        %v1570 = vld [vmem:[%s7 + $0x38] sm:$0xf]
        %v1571 = vld [vmem:[%s7 + $0x3c] sm:$0xf]
        %v1572 = vld [vmem:[%s8] sm:$0x1]
        %v1574 = vlaneseq
        %v1575 = vshrl.u32 %v1574, 7
        %v1576 = vsub.s32 0, %v1575
        %v1577 = vrot.slane %v1572, %v1576
        %v1595 = vunpack.c.l.b16 %v1556
        %v1596 = vunpack.c.l.b16 %v1557
        %v1597 = vunpack.c.l.b16 %v1558
        %v1598 = vunpack.c.l.b16 %v1559
        %v1599 = vunpack.c.l.b16 %v1560
        %v1600 = vunpack.c.l.b16 %v1561
        %v1601 = vunpack.c.l.b16 %v1562
        %v1602 = vunpack.c.l.b16 %v1563
        %v1603 = vunpack.c.l.b16 %v1564
        %v1604 = vunpack.c.l.b16 %v1565
        %v1605 = vunpack.c.l.b16 %v1566
        %v1606 = vunpack.c.l.b16 %v1567
        %v1607 = vunpack.c.l.b16 %v1568
        %v1608 = vunpack.c.l.b16 %v1569
        %v1609 = vunpack.c.l.b16 %v1570
        %v1610 = vunpack.c.l.b16 %v1571
        %v1611 = vpack.c.b16 %v1596, %v1595
        %v1612 = vpack.c.b16 %v1598, %v1597
        %v1613 = vpack.c.b16 %v1600, %v1599
        %v1614 = vpack.c.b16 %v1602, %v1601
        %v1615 = vpack.c.b16 %v1604, %v1603
        %v1616 = vpack.c.b16 %v1606, %v1605
        %v1617 = vpack.c.b16 %v1608, %v1607
        %v1618 = vpack.c.b16 %v1610, %v1609
        %1627 = vmatprep.subr.bf16.mxu0 0
        %1628 = vmatpush1.bf16.msra.mxu0 %v1611
        %1629 = vmatprep.subr.bf16.mxu0 0
        %1630 = vmatpush1.bf16.msra.mxu0 %v1612
        %1631 = vmatprep.subr.bf16.mxu0 0
        %1632 = vmatpush1.bf16.msra.mxu0 %v1613
        %1633 = vmatprep.subr.bf16.mxu0 0
        %1634 = vmatpush1.bf16.msra.mxu0 %v1614
        %1635 = vmatprep.subr.bf16.mxu0 0
        %1636 = vmatpush1.bf16.msra.mxu0 %v1615
        %1637 = vmatprep.subr.bf16.mxu0 0
        %1638 = vmatpush1.bf16.msra.mxu0 %v1616
        %1639 = vmatprep.subr.bf16.mxu0 0
        %1640 = vmatpush1.bf16.msra.mxu0 %v1617
        %1641 = vmatprep.subr.bf16.mxu0 0
        %1642 = vmatpush1.bf16.msra.mxu0 %v1618
        %1643 = vmatprep.subr.bf16.mxu0 0
        %1644 = vmatpush1.bf16.msra.mxu0 0
        %1645 = vmatprep.subr.bf16.mxu0 0
        %1646 = vmatpush1.bf16.msra.mxu0 0
        %1647 = vmatprep.subr.bf16.mxu0 0
        %1648 = vmatpush1.bf16.msra.mxu0 0
        %1649 = vmatprep.subr.bf16.mxu0 0
        %1650 = vmatpush1.bf16.msra.mxu0 0
        %1651 = vmatprep.subr.bf16.mxu0 0
        %1652 = vmatpush1.bf16.msra.mxu0 0
        %1653 = vmatprep.subr.bf16.mxu0 0
        %1654 = vmatpush1.bf16.msra.mxu0 0
        %1655 = vmatprep.subr.bf16.mxu0 0
        %1656 = vmatpush1.bf16.msra.mxu0 0
        %1657 = vmatprep.subr.bf16.mxu0 0
        %1658 = vmatpush1.bf16.msra.mxu0 0
        %1659 = vmatprep.mubr.bf16.mxu0 0
        %1660 = vmatmul.mubr.bf16.gmra.mrb[0].mxu0 %v1548
        %v1661 = vpop.f32.mrb[0].mxu0
        %v1662 = vadd.f32 %v1577, %v1661
        %v1663 = vpop.f32.mrb[0].mxu0
        %v1664 = vpop.f32.mrb[0].mxu0
        %v1665 = vadd.f32 %v1577, %v1664
        %v1666 = vpop.f32.mrb[0].mxu0
        %1667 = vmatprep.mubr.bf16.mxu0 0
        %1668 = vmatmul.mubr.bf16.gmra.mrb[0].mxu0 %v1549
        %v1669 = vpop.f32.mrb[0].mxu0
        %v1670 = vadd.f32 %v1577, %v1669
        %v1671 = vpop.f32.mrb[0].mxu0
        %v1672 = vpop.f32.mrb[0].mxu0
        %v1673 = vadd.f32 %v1577, %v1672
        %v1674 = vpop.f32.mrb[0].mxu0
        %1675 = vmatprep.mubr.bf16.mxu0 0
        %1676 = vmatmul.mubr.bf16.gmra.mrb[0].mxu0 %v1550
        %v1677 = vpop.f32.mrb[0].mxu0
        %v1678 = vadd.f32 %v1577, %v1677
        %v1679 = vpop.f32.mrb[0].mxu0
        %v1680 = vpop.f32.mrb[0].mxu0
        %v1681 = vadd.f32 %v1577, %v1680
        %v1682 = vpop.f32.mrb[0].mxu0
        %1683 = vmatprep.mubr.bf16.mxu0 0
        %1684 = vmatmul.mubr.bf16.gmra.mrb[0].mxu0 %v1551
        %v1685 = vpop.f32.mrb[0].mxu0
        %v1686 = vadd.f32 %v1577, %v1685
        %v1687 = vpop.f32.mrb[0].mxu0
        %v1688 = vpop.f32.mrb[0].mxu0
        %v1689 = vadd.f32 %v1577, %v1688
        %v1690 = vpop.f32.mrb[0].mxu0
        %1691 = vmatprep.mubr.bf16.mxu0 0
        %1692 = vmatmul.mubr.bf16.gmra.mrb[0].mxu0 %v1552
        %v1693 = vpop.f32.mrb[0].mxu0
        %v1694 = vadd.f32 %v1577, %v1693
        %v1695 = vpop.f32.mrb[0].mxu0
        %v1696 = vpop.f32.mrb[0].mxu0
        %v1697 = vadd.f32 %v1577, %v1696
        %v1698 = vpop.f32.mrb[0].mxu0
        %1699 = vmatprep.mubr.bf16.mxu0 0
        %1700 = vmatmul.mubr.bf16.gmra.mrb[0].mxu0 %v1553
        %v1701 = vpop.f32.mrb[0].mxu0
        %v1702 = vadd.f32 %v1577, %v1701
        %v1703 = vpop.f32.mrb[0].mxu0
        %v1704 = vpop.f32.mrb[0].mxu0
        %v1705 = vadd.f32 %v1577, %v1704
        %v1706 = vpop.f32.mrb[0].mxu0
        %1707 = vmatprep.mubr.bf16.mxu0 0
        %1708 = vmatmul.mubr.bf16.gmra.mrb[0].mxu0 %v1554
        %v1709 = vpop.f32.mrb[0].mxu0
        %v1710 = vadd.f32 %v1577, %v1709
        %v1711 = vpop.f32.mrb[0].mxu0
        %v1712 = vpop.f32.mrb[0].mxu0
        %v1713 = vadd.f32 %v1577, %v1712
        %v1714 = vpop.f32.mrb[0].mxu0
        %1715 = vmatprep.mubr.bf16.mxu0 0
        %1716 = vmatmul.mubr.bf16.gmra.mrb[0].mxu0 %v1555
        %v1717 = vpop.f32.mrb[0].mxu0
        %v1718 = vadd.f32 %v1577, %v1717
        %v1719 = vpop.f32.mrb[0].mxu0
        %v1720 = vpop.f32.mrb[0].mxu0
        %v1721 = vadd.f32 %v1577, %v1720
        %v1722 = vpop.f32.mrb[0].mxu0
        %1723 = vdwg.mxu0
        %v1724 = vmul.f32 %v805, %v1662
        %v1725 = vmul.f32 %v810, %v1665
        %v1726 = vmul.f32 %v815, %v1670
        %v1727 = vmul.f32 %v820, %v1673
        %v1728 = vmul.f32 %v825, %v1678
        %v1729 = vmul.f32 %v830, %v1681
        %v1730 = vmul.f32 %v835, %v1686
        %v1731 = vmul.f32 %v840, %v1689
        %v1732 = vmul.f32 %v845, %v1694
        %v1733 = vmul.f32 %v850, %v1697
        %v1734 = vmul.f32 %v855, %v1702
        %v1735 = vmul.f32 %v860, %v1705
        %v1736 = vmul.f32 %v865, %v1710
        %v1737 = vmul.f32 %v870, %v1713
        %v1738 = vmul.f32 %v875, %v1718
        %v1739 = vmul.f32 %v880, %v1721
        %v1740 = vmax.f32 %v1724, 0.0
        %v1741 = vmax.f32 %v1725, 0.0
        %v1742 = vmax.f32 %v1726, 0.0
        %v1743 = vmax.f32 %v1727, 0.0
        %v1744 = vmax.f32 %v1728, 0.0
        %v1745 = vmax.f32 %v1729, 0.0
        %v1746 = vmax.f32 %v1730, 0.0
        %v1747 = vmax.f32 %v1731, 0.0
        %v1748 = vmax.f32 %v1732, 0.0
        %v1749 = vmax.f32 %v1733, 0.0
        %v1750 = vmax.f32 %v1734, 0.0
        %v1751 = vmax.f32 %v1735, 0.0
        %v1752 = vmax.f32 %v1736, 0.0
        %v1753 = vmax.f32 %v1737, 0.0
        %v1754 = vmax.f32 %v1738, 0.0
        %v1755 = vmax.f32 %v1739, 0.0
        %v1756 = vand.u32 2147483647, %v1724
        %v1757 = vand.u32 2147483647, %v1725
        %v1758 = vand.u32 2147483647, %v1726
        %v1759 = vand.u32 2147483647, %v1727
        %v1760 = vand.u32 2147483647, %v1728
        %v1761 = vand.u32 2147483647, %v1729
        %v1762 = vand.u32 2147483647, %v1730
        %v1763 = vand.u32 2147483647, %v1731
        %v1764 = vand.u32 2147483647, %v1732
        %v1765 = vand.u32 2147483647, %v1733
        %v1766 = vand.u32 2147483647, %v1734
        %v1767 = vand.u32 2147483647, %v1735
        %v1768 = vand.u32 2147483647, %v1736
        %v1769 = vand.u32 2147483647, %v1737
        %v1770 = vand.u32 2147483647, %v1738
        %v1771 = vand.u32 2147483647, %v1739
        %v1772 = vsub.f32 0.0, %v1756
        %v1773 = vsub.f32 0.0, %v1757
        %v1774 = vsub.f32 0.0, %v1758
        %v1775 = vsub.f32 0.0, %v1759
        %v1776 = vsub.f32 0.0, %v1760
        %v1777 = vsub.f32 0.0, %v1761
        %v1778 = vsub.f32 0.0, %v1762
        %v1779 = vsub.f32 0.0, %v1763
        %v1780 = vsub.f32 0.0, %v1764
        %v1781 = vsub.f32 0.0, %v1765
        %v1782 = vsub.f32 0.0, %v1766
        %v1783 = vsub.f32 0.0, %v1767
        %v1784 = vsub.f32 0.0, %v1768
        %v1785 = vsub.f32 0.0, %v1769
        %v1786 = vsub.f32 0.0, %v1770
        %v1787 = vsub.f32 0.0, %v1771
        %v1788 = vmul.f32 %v1772, 1.442695
        %v1789 = vpow.pop %v1788
        %v1790 = vmul.f32 %v1773, 1.442695
        %v1791 = vpow.pop %v1790
        %v1792 = vmul.f32 %v1774, 1.442695
        %v1793 = vpow.pop %v1792
        %v1794 = vmul.f32 %v1775, 1.442695
        %v1795 = vpow.pop %v1794
        %v1796 = vmul.f32 %v1776, 1.442695
        %v1797 = vpow.pop %v1796
        %v1798 = vmul.f32 %v1777, 1.442695
        %v1799 = vpow.pop %v1798
        %v1800 = vmul.f32 %v1778, 1.442695
        %v1801 = vpow.pop %v1800
        %v1802 = vmul.f32 %v1779, 1.442695
        %v1803 = vpow.pop %v1802
        %v1804 = vmul.f32 %v1780, 1.442695
        %v1805 = vpow.pop %v1804
        %v1806 = vmul.f32 %v1781, 1.442695
        %v1807 = vpow.pop %v1806
        %v1808 = vmul.f32 %v1782, 1.442695
        %v1809 = vpow.pop %v1808
        %v1810 = vmul.f32 %v1783, 1.442695
        %v1811 = vpow.pop %v1810
        %v1812 = vmul.f32 %v1784, 1.442695
        %v1813 = vpow.pop %v1812
        %v1814 = vmul.f32 %v1785, 1.442695
        %v1815 = vpow.pop %v1814
        %v1816 = vmul.f32 %v1786, 1.442695
        %v1817 = vpow.pop %v1816
        %v1818 = vmul.f32 %v1787, 1.442695
        %v1819 = vpow.pop %v1818
        %v1820 = vadd.f32 %v1789, 1.0
        %v1821 = vadd.f32 %v1791, 1.0
        %v1822 = vadd.f32 %v1793, 1.0
        %v1823 = vadd.f32 %v1795, 1.0
        %v1824 = vadd.f32 %v1797, 1.0
        %v1825 = vadd.f32 %v1799, 1.0
        %v1826 = vadd.f32 %v1801, 1.0
        %v1827 = vadd.f32 %v1803, 1.0
        %v1828 = vadd.f32 %v1805, 1.0
        %v1829 = vadd.f32 %v1807, 1.0
        %v1830 = vadd.f32 %v1809, 1.0
        %v1831 = vadd.f32 %v1811, 1.0
        %v1832 = vadd.f32 %v1813, 1.0
        %v1833 = vadd.f32 %v1815, 1.0
        %v1834 = vadd.f32 %v1817, 1.0
        %v1835 = vadd.f32 %v1819, 1.0
        %v1836 = vlog2.pop %v1820
        %v1837 = vmul.f32 %v1836, 0.6931472
        %v1838 = vlog2.pop %v1821
        %v1839 = vmul.f32 %v1838, 0.6931472
        %v1840 = vlog2.pop %v1822
        %v1841 = vmul.f32 %v1840, 0.6931472
        %v1842 = vlog2.pop %v1823
        %v1843 = vmul.f32 %v1842, 0.6931472
        %v1844 = vlog2.pop %v1824
        %v1845 = vmul.f32 %v1844, 0.6931472
        %v1846 = vlog2.pop %v1825
        %v1847 = vmul.f32 %v1846, 0.6931472
        %v1848 = vlog2.pop %v1826
        %v1849 = vmul.f32 %v1848, 0.6931472
        %v1850 = vlog2.pop %v1827
        %v1851 = vmul.f32 %v1850, 0.6931472
        %v1852 = vlog2.pop %v1828
        %v1853 = vmul.f32 %v1852, 0.6931472
        %v1854 = vlog2.pop %v1829
        %v1855 = vmul.f32 %v1854, 0.6931472
        %v1856 = vlog2.pop %v1830
        %v1857 = vmul.f32 %v1856, 0.6931472
        %v1858 = vlog2.pop %v1831
        %v1859 = vmul.f32 %v1858, 0.6931472
        %v1860 = vlog2.pop %v1832
        %v1861 = vmul.f32 %v1860, 0.6931472
        %v1862 = vlog2.pop %v1833
        %v1863 = vmul.f32 %v1862, 0.6931472
        %v1864 = vlog2.pop %v1834
        %v1865 = vmul.f32 %v1864, 0.6931472
        %v1866 = vlog2.pop %v1835
        %v1867 = vmul.f32 %v1866, 0.6931472
        %v1868 = vadd.f32 %v1740, %v1837
        %v1869 = vadd.f32 %v1741, %v1839
        %v1870 = vadd.f32 %v1742, %v1841
        %v1871 = vadd.f32 %v1743, %v1843
        %v1872 = vadd.f32 %v1744, %v1845
        %v1873 = vadd.f32 %v1745, %v1847
        %v1874 = vadd.f32 %v1746, %v1849
        %v1875 = vadd.f32 %v1747, %v1851
        %v1876 = vadd.f32 %v1748, %v1853
        %v1877 = vadd.f32 %v1749, %v1855
        %v1878 = vadd.f32 %v1750, %v1857
        %v1879 = vadd.f32 %v1751, %v1859
        %v1880 = vadd.f32 %v1752, %v1861
        %v1881 = vadd.f32 %v1753, %v1863
        %v1882 = vadd.f32 %v1754, %v1865
        %v1883 = vadd.f32 %v1755, %v1867
        %v1884 = vpack.c.bf16 %v1869, %v1868
        %v1885 = vpack.c.bf16 %v1871, %v1870
        %v1886 = vpack.c.bf16 %v1873, %v1872
        %v1887 = vpack.c.bf16 %v1875, %v1874
        %v1888 = vpack.c.bf16 %v1877, %v1876
        %v1889 = vpack.c.bf16 %v1879, %v1878
        %v1890 = vpack.c.bf16 %v1881, %v1880
        %v1891 = vpack.c.bf16 %v1883, %v1882
        %v1892 = vld [vmem:[%s9] sm:$0xf]
        %v1893 = vld [vmem:[%s9 + $0x4] sm:$0xf]
        %v1894 = vld [vmem:[%s9 + $0x8] sm:$0xf]
        %v1895 = vld [vmem:[%s9 + $0xc] sm:$0xf]
        %v1896 = vld [vmem:[%s9 + $0x10] sm:$0xf]
        %v1897 = vld [vmem:[%s9 + $0x14] sm:$0xf]
        %v1898 = vld [vmem:[%s9 + $0x18] sm:$0xf]
        %v1899 = vld [vmem:[%s9 + $0x1c] sm:$0xf]
        %v1900 = vld [vmem:[%s9 + $0x20] sm:$0xf]
        %v1901 = vld [vmem:[%s9 + $0x24] sm:$0xf]
        %v1902 = vld [vmem:[%s9 + $0x28] sm:$0xf]
        %v1903 = vld [vmem:[%s9 + $0x2c] sm:$0xf]
        %v1904 = vld [vmem:[%s9 + $0x30] sm:$0xf]
        %v1905 = vld [vmem:[%s9 + $0x34] sm:$0xf]
        %v1906 = vld [vmem:[%s9 + $0x38] sm:$0xf]
        %v1907 = vld [vmem:[%s9 + $0x3c] sm:$0xf]
        %v1908 = vld [vmem:[%s10] sm:$0x1]
        %v1910 = vlaneseq
        %v1911 = vshrl.u32 %v1910, 7
        %v1912 = vsub.s32 0, %v1911
        %v1913 = vrot.slane %v1908, %v1912
        %v1931 = vunpack.c.l.b16 %v1892
        %v1932 = vunpack.c.l.b16 %v1893
        %v1933 = vunpack.c.l.b16 %v1894
        %v1934 = vunpack.c.l.b16 %v1895
        %v1935 = vunpack.c.l.b16 %v1896
        %v1936 = vunpack.c.l.b16 %v1897
        %v1937 = vunpack.c.l.b16 %v1898
        %v1938 = vunpack.c.l.b16 %v1899
        %v1939 = vunpack.c.l.b16 %v1900
        %v1940 = vunpack.c.l.b16 %v1901
        %v1941 = vunpack.c.l.b16 %v1902
        %v1942 = vunpack.c.l.b16 %v1903
        %v1943 = vunpack.c.l.b16 %v1904
        %v1944 = vunpack.c.l.b16 %v1905
        %v1945 = vunpack.c.l.b16 %v1906
        %v1946 = vunpack.c.l.b16 %v1907
        %v1947 = vpack.c.b16 %v1932, %v1931
        %v1948 = vpack.c.b16 %v1934, %v1933
        %v1949 = vpack.c.b16 %v1936, %v1935
        %v1950 = vpack.c.b16 %v1938, %v1937
        %v1951 = vpack.c.b16 %v1940, %v1939
        %v1952 = vpack.c.b16 %v1942, %v1941
        %v1953 = vpack.c.b16 %v1944, %v1943
        %v1954 = vpack.c.b16 %v1946, %v1945
        %1963 = vmatprep.subr.bf16.mxu0 0
        %1964 = vmatpush1.bf16.msra.mxu0 %v1947
        %1965 = vmatprep.subr.bf16.mxu0 0
        %1966 = vmatpush1.bf16.msra.mxu0 %v1948
        %1967 = vmatprep.subr.bf16.mxu0 0
        %1968 = vmatpush1.bf16.msra.mxu0 %v1949
        %1969 = vmatprep.subr.bf16.mxu0 0
        %1970 = vmatpush1.bf16.msra.mxu0 %v1950
        %1971 = vmatprep.subr.bf16.mxu0 0
        %1972 = vmatpush1.bf16.msra.mxu0 %v1951
        %1973 = vmatprep.subr.bf16.mxu0 0
        %1974 = vmatpush1.bf16.msra.mxu0 %v1952
        %1975 = vmatprep.subr.bf16.mxu0 0
        %1976 = vmatpush1.bf16.msra.mxu0 %v1953
        %1977 = vmatprep.subr.bf16.mxu0 0
        %1978 = vmatpush1.bf16.msra.mxu0 %v1954
        %1979 = vmatprep.subr.bf16.mxu0 0
        %1980 = vmatpush1.bf16.msra.mxu0 0
        %1981 = vmatprep.subr.bf16.mxu0 0
        %1982 = vmatpush1.bf16.msra.mxu0 0
        %1983 = vmatprep.subr.bf16.mxu0 0
        %1984 = vmatpush1.bf16.msra.mxu0 0
        %1985 = vmatprep.subr.bf16.mxu0 0
        %1986 = vmatpush1.bf16.msra.mxu0 0
        %1987 = vmatprep.subr.bf16.mxu0 0
        %1988 = vmatpush1.bf16.msra.mxu0 0
        %1989 = vmatprep.subr.bf16.mxu0 0
        %1990 = vmatpush1.bf16.msra.mxu0 0
        %1991 = vmatprep.subr.bf16.mxu0 0
        %1992 = vmatpush1.bf16.msra.mxu0 0
        %1993 = vmatprep.subr.bf16.mxu0 0
        %1994 = vmatpush1.bf16.msra.mxu0 0
        %1995 = vmatprep.mubr.bf16.mxu0 0
        %1996 = vmatmul.mubr.bf16.gmra.mrb[0].mxu0 %v1884
        %v1997 = vpop.f32.mrb[0].mxu0
        %v1998 = vadd.f32 %v1913, %v1997
        %v1999 = vpop.f32.mrb[0].mxu0
        %v2000 = vpop.f32.mrb[0].mxu0
        %v2001 = vadd.f32 %v1913, %v2000
        %v2002 = vpop.f32.mrb[0].mxu0
        %2003 = vmatprep.mubr.bf16.mxu0 0
        %2004 = vmatmul.mubr.bf16.gmra.mrb[0].mxu0 %v1885
        %v2005 = vpop.f32.mrb[0].mxu0
        %v2006 = vadd.f32 %v1913, %v2005
        %v2007 = vpop.f32.mrb[0].mxu0
        %v2008 = vpop.f32.mrb[0].mxu0
        %v2009 = vadd.f32 %v1913, %v2008
        %v2010 = vpop.f32.mrb[0].mxu0
        %2011 = vmatprep.mubr.bf16.mxu0 0
        %2012 = vmatmul.mubr.bf16.gmra.mrb[0].mxu0 %v1886
        %v2013 = vpop.f32.mrb[0].mxu0
        %v2014 = vadd.f32 %v1913, %v2013
        %v2015 = vpop.f32.mrb[0].mxu0
        %v2016 = vpop.f32.mrb[0].mxu0
        %v2017 = vadd.f32 %v1913, %v2016
        %v2018 = vpop.f32.mrb[0].mxu0
        %2019 = vmatprep.mubr.bf16.mxu0 0
        %2020 = vmatmul.mubr.bf16.gmra.mrb[0].mxu0 %v1887
        %v2021 = vpop.f32.mrb[0].mxu0
        %v2022 = vadd.f32 %v1913, %v2021
        %v2023 = vpop.f32.mrb[0].mxu0
        %v2024 = vpop.f32.mrb[0].mxu0
        %v2025 = vadd.f32 %v1913, %v2024
        %v2026 = vpop.f32.mrb[0].mxu0
        %2027 = vmatprep.mubr.bf16.mxu0 0
        %2028 = vmatmul.mubr.bf16.gmra.mrb[0].mxu0 %v1888
        %v2029 = vpop.f32.mrb[0].mxu0
        %v2030 = vadd.f32 %v1913, %v2029
        %v2031 = vpop.f32.mrb[0].mxu0
        %v2032 = vpop.f32.mrb[0].mxu0
        %v2033 = vadd.f32 %v1913, %v2032
        %v2034 = vpop.f32.mrb[0].mxu0
        %2035 = vmatprep.mubr.bf16.mxu0 0
        %2036 = vmatmul.mubr.bf16.gmra.mrb[0].mxu0 %v1889
        %v2037 = vpop.f32.mrb[0].mxu0
        %v2038 = vadd.f32 %v1913, %v2037
        %v2039 = vpop.f32.mrb[0].mxu0
        %v2040 = vpop.f32.mrb[0].mxu0
        %v2041 = vadd.f32 %v1913, %v2040
        %v2042 = vpop.f32.mrb[0].mxu0
        %2043 = vmatprep.mubr.bf16.mxu0 0
        %2044 = vmatmul.mubr.bf16.gmra.mrb[0].mxu0 %v1890
        %v2045 = vpop.f32.mrb[0].mxu0
        %v2046 = vadd.f32 %v1913, %v2045
        %v2047 = vpop.f32.mrb[0].mxu0
        %v2048 = vpop.f32.mrb[0].mxu0
        %v2049 = vadd.f32 %v1913, %v2048
        %v2050 = vpop.f32.mrb[0].mxu0
        %2051 = vmatprep.mubr.bf16.mxu0 0
        %2052 = vmatmul.mubr.bf16.gmra.mrb[0].mxu0 %v1891
        %v2053 = vpop.f32.mrb[0].mxu0
        %v2054 = vadd.f32 %v1913, %v2053
        %v2055 = vpop.f32.mrb[0].mxu0
        %v2056 = vpop.f32.mrb[0].mxu0
        %v2057 = vadd.f32 %v1913, %v2056
        %v2058 = vpop.f32.mrb[0].mxu0
        %2059 = vdwg.mxu0
        %2060 = vst [vmem:[%s396] sm:$0xff] %v1998
        %2061 = vst [vmem:[%s396 + $0x8] sm:$0xff] %v2001
        %2062 = vst [vmem:[%s396 + $0x10] sm:$0xff] %v2006
        %2063 = vst [vmem:[%s396 + $0x18] sm:$0xff] %v2009
        %2064 = vst [vmem:[%s396 + $0x20] sm:$0xff] %v2014
        %2065 = vst [vmem:[%s396 + $0x28] sm:$0xff] %v2017
        %2066 = vst [vmem:[%s396 + $0x30] sm:$0xff] %v2022
        %2067 = vst [vmem:[%s396 + $0x38] sm:$0xff] %v2025
        %2068 = vst [vmem:[%s396 + $0x40] sm:$0xff] %v2030
        %2069 = vst [vmem:[%s396 + $0x48] sm:$0xff] %v2033
        %2070 = vst [vmem:[%s396 + $0x50] sm:$0xff] %v2038
        %2071 = vst [vmem:[%s396 + $0x58] sm:$0xff] %v2041
        %2072 = vst [vmem:[%s396 + $0x60] sm:$0xff] %v2046
        %2073 = vst [vmem:[%s396 + $0x68] sm:$0xff] %v2049
        %2074 = vst [vmem:[%s396 + $0x70] sm:$0xff] %v2054
        %2075 = vst [vmem:[%s396 + $0x78] sm:$0xff] %v2057
        %s2076 = sand.u32 %s274, 1
        %s2077 = scalar_lea.sflag [#allocation3], %s2076
        %s2078 = sand.u32 %s274, 1
        %s2079 = smul.addr %s2078, 128
        %s2080 = scalar_lea.vmem [#allocation2], %s2079
        // Predicated region
        $region65: #{tpu_custom_call.1} parent=63 // pred_check
          %p2081 = pneg %p284
        $region66: #{tpu_custom_call.1} parent=63 // pred_check_branch
          %2083 = sbr.rel (%p2081) target = $region68
        $region67: #{tpu_custom_call.1} parent=63 // pred_region
          %s2084 = smul.u32 16, %s25
          %s2086 = ssub.s32 2048, 2048
          %2087 = vsyncadd %s2077, %s2086
          %s2088 = smul.addr %s2084, 128
          %s2089 = scalar_lea.hbm %s11, %s2088
          %s2090 = sshll.u32 %s2080, 4
          %s2091 = int_to_ptr.vmem [resolvable:$true] %s2090
          %2096 = dma.vmem_to_hbm [thread:$0]  %s2091, 2048, %s2089, %s2077, 128, 128, 8
        $region68: #{tpu_custom_call.1} parent=63 // pred_fallthru
          _
      $region64: #{tpu_custom_call.1} parent=5 // pred_fallthru
        _
      %p2097 = scmp.le.s32.totalorder 2, %s20
      // Predicated region
      $region69: #{tpu_custom_call.1} parent=5 // pred_check
        %p2098 = pneg %p2097
      $region70: #{tpu_custom_call.1} parent=5 // pred_check_branch
        %2100 = sbr.rel (%p2098) target = $region72
      $region71: #{tpu_custom_call.1} parent=5 // pred_region
        %s2101 = ssub.s32 %s20, 2
        // Predicated region
        $region73: #{tpu_custom_call.1} parent=71 // pred_check
          %p2102 = pneg %p290
        $region74: #{tpu_custom_call.1} parent=71 // pred_check_branch
          %2104 = sbr.rel (%p2102) target = $region76
        $region75: #{tpu_custom_call.1} parent=71 // pred_region
          %s2105 = sand.u32 %s275, 1
          %s2106 = scalar_lea.sflag [#allocation3], %s2105
          %s2107 = sand.u32 %s275, 1
          %s2108 = smul.addr %s2107, 128
          %s2109 = scalar_lea.vmem [#allocation2], %s2108
          %2110 = dma.done %s2106, 2048
        $region76: #{tpu_custom_call.1} parent=71 // pred_fallthru
          _
      $region72: #{tpu_custom_call.1} parent=5 // pred_fallthru
        _
    $region6: #{tpu_custom_call.1} parent=1 // loop_footer
      %s24 = sadd.s32 1, %s20
    $region7: #{tpu_custom_call.1} parent=1 // loop_footer_branch
      %19 = sbr.rel target = $region3
    $region8: #{tpu_custom_call.1} parent=1 // loop_exit
      _
    %2111 = vsyncpa [#allocation3], 1
    %s2112 = scalar_lea.sflag [#allocation3], 1
    %2113 = vsyncpa %s2112, 1

</llo_original>
